<compile_context>
chip_gen: v7x
topology: tpu7x:2x2x1
jax: 0.10.0
libtpu: 0.0.40
codegen_flags: <defaults>
</compile_context>

<pallas_src>
import functools
import math

import jax
import jax.numpy as jnp
from jax import lax
from jax.experimental import pallas as pl
from jax.experimental.pallas import tpu as pltpu


# ----------------------------- Pallas kernel --------------------------------

def dla_attn_kernel(q_ref, kt_ref, vt_ref, tt_ref, mask_ref, qt_ref, st_ref,
                    wo_ref, bo_ref, out_ref, *, approx_recip=False):
    # Block shapes per grid step:
    #   q_ref    (Bt, Rt, E)   projected Q                      (mxu dtype)
    #   kt_ref   (Bt, E,  S)   projected K, pre-transposed      (mxu dtype)
    #   vt_ref   (Bt, D,  S)   value, S on lanes                (f32)
    #   tt_ref   (Bt, 1,  S)   observation times                (f32)
    #   mask_ref (Bt, D,  S)   observation mask                 (int8)
    #   qt_ref   (Rt, 1)       reference times of this R tile   (f32)
    #   st_ref   (1,  D)       sigmoid(range(stride))           (f32)
    #   wo_ref   (D,  NHp)     output proj, lane-padded, W^T    (mxu dtype)
    #   bo_ref   (1,  NHp)                                      (f32)
    #   out_ref  (Bt, Rt, NHp)                                  (f32)
    Bt, Rt, E = q_ref.shape
    S = kt_ref.shape[2]
    D = vt_ref.shape[1]
    scale = 1.0 / math.sqrt(E)   # embed_time_k == embed_time for num_heads=1

    # Scaled dot-product scores for the whole block: one batched MXU op,
    # 'nn' contraction (K already transposed in the wrapper).
    scores = lax.dot_general(
        q_ref[...], kt_ref[...],
        (((2,), (1,)), ((0,), (0,))),
        preferred_element_type=jnp.float32) * scale              # (Bt, Rt, S)

    # Time-window + observation mask, S on the lane dim: (Bt, Rt, D, S).
    qt4 = qt_ref[...].reshape(1, Rt, 1, 1)
    st4 = st_ref[...].reshape(1, 1, D, 1)
    hi = qt4 + st4                                               # (1, Rt, D, 1)
    lo = qt4 - st4
    tt4 = tt_ref[...].reshape(Bt, 1, 1, S)
    obs = (mask_ref[...] != 0)[:, None, :, :]                    # (Bt, 1, D, S)
    m = jnp.logical_and(jnp.logical_and(tt4 <= hi, tt4 >= lo), obs)

    # Masked softmax over S exactly as the PyTorch module (-1e9 fill, max and
    # normalization per (r, d)).  The max entry always contributes exp(0)=1 so
    # den >= 1, and the all-masked case degenerates to a uniform distribution
    # (mean of value) automatically.  exp -> EUP, lane reductions -> XLU.
    s4 = jnp.where(m, jnp.broadcast_to(scores[:, :, None, :], m.shape),
                   jnp.float32(-1e9))                            # (Bt, Rt, D, S)
    mx = jnp.max(s4, axis=-1, keepdims=True)                     # (Bt, Rt, D, 1)
    e = jnp.exp(s4 - mx)                                         # (Bt, Rt, D, S)
    den = jnp.sum(e, axis=-1)                                    # (Bt, Rt, D)
    num = jnp.sum(e * vt_ref[...][:, None, :, :], axis=-1)       # (Bt, Rt, D)
    if approx_recip:
        ctx = num * pl.reciprocal(den, approx=True)              # EUP, off the VPU
    else:
        ctx = num / den

    # Output projection: fold (Bt, Rt) into M so the MXU sees Bt*Rt rows in one
    # push; NHp is a multiple of 128 -> unmasked lane-dense store.
    ctx2 = ctx.reshape(Bt * Rt, D).astype(wo_ref.dtype)
    out = jnp.dot(ctx2, wo_ref[...], preferred_element_type=jnp.float32)
    out = out + bo_ref[...]
    out_ref[...] = out.reshape(Bt, Rt, out.shape[-1])


# --------------------------- block-size heuristic -----------------------------

def _choose_blocks(B, R, S, D, E, NHp, mxu_itemsize):
    """Generation-aware blocking: large single-step blocks on 1-TC/128-MiB chips
    (v5e/v6e); >=2 grid steps and a ~48 MiB budget on 2-TC/64-MiB v7x."""
    try:
        vmem_cap = int(getattr(pltpu.get_tpu_info(), "vmem_capacity_bytes", 0))
    except Exception:
        vmem_cap = 0
    if vmem_cap <= 0:
        vmem_cap = 64 * 2 ** 20                      # conservative: assume v7x
    two_tc = vmem_cap < 100 * 2 ** 20                # v7x: 64 MiB/TC, 2 TensorCores
    limit = (48 if two_tc else 100) * 2 ** 20

    def step_bytes(bb, br):
        interm = 5 * bb * br * D * S * 4             # (bb,br,D,S) f32/bool temps
        ins = 2 * (bb * br * E * mxu_itemsize        # Q   (double-buffered)
                   + bb * E * S * mxu_itemsize       # K^T
                   + bb * D * S * 4                  # V^T
                   + bb * D * S                      # mask int8
                   + bb * S * 4)                     # tt
        outs = 2 * bb * br * NHp * 4
        consts = 2 * (R + D + D * NHp + NHp) * 4
        return interm + ins + outs + consts

    r_tiles = sorted({r for r in range(8, R + 1)
                      if R % r == 0 and r % 8 == 0} | {R}, reverse=True)
    b_tiles = sorted([d for d in range(1, B + 1) if B % d == 0], reverse=True)
    for br in r_tiles:                               # prefer full R per step
        for bb in b_tiles:                           # prefer as much batch as fits
            if step_bytes(bb, br) > limit:
                continue
            if two_tc and (B // bb) * (R // br) < 2 and not (
                    bb == 1 and br == r_tiles[-1]):
                continue                             # keep both v7x cores busy
            return bb, br, limit
    return 1, r_tiles[-1], limit


# ------------------------------- wrapper -------------------------------------

def dla_forward(params, query, key, value, mask, qt, tt, stride_in,
                *, mxu_dtype=jnp.bfloat16):
    B, R, E = query.shape
    S = key.shape[1]
    D = value.shape[-1]
    NH = params["wo"].shape[0]
    NHp = ((NH + 127) // 128) * 128
    f32 = jnp.float32

    # stride = sigmoid(range(stride_in)) -- tiny, plain JAX (no pallas dispatch).
    stride = jax.nn.sigmoid(stride_in @ params["wr"].T + params["br"])       # (D,)

    # Q/K projections hoisted out of the kernel as single batched matmuls
    # (B folded into M, weights pre-transposed).  K is produced as (B, E, S)
    # so the in-kernel score contraction is 'nn' (no in-kernel transpose).
    Q = (query.reshape(B * R, E) @ params["wq"].T + params["bq"]).reshape(B, R, E)
    K = (key.reshape(B * S, E) @ params["wk"].T + params["bk"]).reshape(B, S, E)
    Q = Q.astype(mxu_dtype)
    Kt = jnp.transpose(K, (0, 2, 1)).astype(mxu_dtype)            # (B, E, S)

    # S-on-lanes layouts for value / mask; tt stays (B, 1, S).
    Vt = jnp.transpose(value.astype(f32), (0, 2, 1))              # (B, D, S)
    Mt = jnp.transpose((mask != 0).astype(jnp.int8), (0, 2, 1))   # (B, D, S) int8
    tt3 = tt.reshape(B, 1, S).astype(f32)
    qt2 = qt.reshape(R, 1).astype(f32)
    st2 = stride.reshape(1, D).astype(f32)

    # Output projection weights, lane-padded to a multiple of 128.
    wo_t = jnp.zeros((D, NHp), f32).at[:, :NH].set(params["wo"].T.astype(f32))
    wo_t = wo_t.astype(mxu_dtype)
    bo_p = jnp.zeros((1, NHp), f32).at[:, :NH].set(params["bo"].astype(f32))

    block_b, block_r, vmem_limit = _choose_blocks(
        B, R, S, D, E, NHp, jnp.dtype(mxu_dtype).itemsize)

    bm_br = lambda b, r: (b, r, 0)      # batch + R blocked (Q, out)
    bm_b = lambda b, r: (b, 0, 0)       # batch blocked (K^T, V^T, mask, tt)
    cm_r = lambda b, r: (r, 0)          # R blocked (qt)
    cm = lambda b, r: (0, 0)            # shared constants
    # NOTE: the four constant-index operands are tiny; default double-buffering
    # costs only a few KiB, so pipeline_mode tweaks are skipped.

    kernel = functools.partial(dla_attn_kernel,
                               approx_recip=(mxu_dtype != jnp.float32))

    out = pl.pallas_call(
        kernel,
        out_shape=jax.ShapeDtypeStruct((B, R, NHp), f32),
        grid=(B // block_b, R // block_r),
        in_specs=[
            pl.BlockSpec((block_b, block_r, E), bm_br),   # Q (projected)
            pl.BlockSpec((block_b, E, S), bm_b),          # K^T (projected)
            pl.BlockSpec((block_b, D, S), bm_b),          # V^T
            pl.BlockSpec((block_b, 1, S), bm_b),          # tt
            pl.BlockSpec((block_b, D, S), bm_b),          # mask (int8)
            pl.BlockSpec((block_r, 1), cm_r),             # qt
            pl.BlockSpec((1, D), cm),                     # stride (post-sigmoid)
            pl.BlockSpec((D, NHp), cm),                   # Wout^T (lane-padded)
            pl.BlockSpec((1, NHp), cm),                   # bout   (lane-padded)
        ],
        out_specs=pl.BlockSpec((block_b, block_r, NHp), bm_br),
        compiler_params=pltpu.CompilerParams(
            dimension_semantics=("parallel", "parallel"),
            vmem_limit_bytes=vmem_limit,
        ),
    )(Q, Kt, Vt, tt3, Mt, qt2, st2, wo_t, bo_p)

    return out[:, :, :NH], stride


# --------------------------- pure-JAX reference -------------------------------

def dla_reference(params, query, key, value, mask, qt, tt, stride_in):
    E = params["wq"].shape[0]
    stride = jax.nn.sigmoid(stride_in @ params["wr"].T + params["br"])        # (D,)
    Q = query @ params["wq"].T + params["bq"]                                 # (B,R,E)
    K = key @ params["wk"].T + params["bk"]                                   # (B,S,E)
    scores = jnp.einsum("bre,bse->brs", Q, K) / math.sqrt(E)                  # (B,R,S)
    tt_b = tt[:, None, :, None]
    qt_b = qt[None, :, None, None]
    st_b = stride[None, None, None, :]
    m = (tt_b <= qt_b + st_b) & (tt_b >= qt_b - st_b) & (mask[:, None, :, :] != 0)
    s = jnp.where(m, scores[..., None], -1000000000.0)
    s = jnp.broadcast_to(s, m.shape)
    p = jax.nn.softmax(s, axis=-2)
    ctx = jnp.sum(p * value[:, None, :, :], axis=-2)                          # (B,R,D)
    out = ctx @ params["wo"].T + params["bo"]                                 # (B,R,NH)
    return out, stride


# --------------------------------- main ---------------------------------------

if __name__ == "__main__":
    # small shapes consistent with the module (num_heads = 1, the default)
    B, S, R = 4, 8, 8          # batch, seq_len, number of reference time points
    D = 4                      # input_dim
    E = 16                     # embed_time
    NH = 16                    # nhidden

    key0 = jax.random.PRNGKey(0)
    ks = jax.random.split(key0, 16)

    def lin_init(kw, kb, out_f, in_f):
        bound = 1.0 / math.sqrt(in_f)
        w = jax.random.uniform(kw, (out_f, in_f), jnp.float32, -bound, bound)
        b = jax.random.uniform(kb, (out_f,), jnp.float32, -bound, bound)
        return w, b

    wq, bq = lin_init(ks[0], ks[1], E, E)       # linears[0]
    wk, bk = lin_init(ks[2], ks[3], E, E)       # linears[1]
    wo, bo = lin_init(ks[4], ks[5], NH, D)      # linears[2] (input_dim -> nhidden)
    wr, br = lin_init(ks[6], ks[7], D, D)       # self.range
    params = dict(wq=wq, bq=bq, wk=wk, bk=bk, wo=wo, bo=bo, wr=wr, br=br)

    query = jax.random.normal(ks[8], (B, R, E), jnp.float32)   # time-embedded query times
    keyt = jax.random.normal(ks[9], (B, S, E), jnp.float32)    # time-embedded obs times
    value = jax.random.normal(ks[10], (B, S, D), jnp.float32)
    mask = (jax.random.uniform(ks[11], (B, S, D)) > 0.3).astype(jnp.float32)
    qt = jnp.sort(jax.random.uniform(ks[12], (R,), jnp.float32))
    tt = jnp.sort(jax.random.uniform(ks[13], (B, S), jnp.float32), axis=-1)
    stride_in = jax.random.normal(ks[14], (D,), jnp.float32)

    ref_out, ref_stride = dla_reference(params, query, keyt, value, mask, qt, tt, stride_in)

    # strict-precision path (f32 MXU operands): must match the reference tightly.
    out, stride = dla_forward(params, query, keyt, value, mask, qt, tt, stride_in,
                              mxu_dtype=jnp.float32)
    jax.block_until_ready((out, stride))
    assert out.shape == (B, R, NH) and stride.shape == (D,)
    assert jnp.allclose(out, ref_out, atol=1e-4, rtol=1e-4), \
        float(jnp.max(jnp.abs(out - ref_out)))
    assert jnp.allclose(stride, ref_stride, atol=1e-5, rtol=1e-5)

    # fast path (bf16 MXU operands + approx reciprocal): smoke-test only.
    out_bf16, _ = dla_forward(params, query, keyt, value, mask, qt, tt, stride_in,
                              mxu_dtype=jnp.bfloat16)
    jax.block_until_ready(out_bf16)
    assert float(jnp.max(jnp.abs(out_bf16 - ref_out))) < 0.25

    print("KERNEL_OK")
</pallas_src>

<mosaic_0001>
module attributes {stable_mosaic.version = 11 : i64} {
  func.func @dla_attn_kernel(%arg0: i32, %arg1: i32, %arg2: memref<2x8x16xf32, #tpu.memory_space<vmem>>, %arg3: memref<2x16x8xf32, #tpu.memory_space<vmem>>, %arg4: memref<2x4x8xf32, #tpu.memory_space<vmem>>, %arg5: memref<2x1x8xf32, #tpu.memory_space<vmem>>, %arg6: memref<2x4x8xi8, #tpu.memory_space<vmem>>, %arg7: memref<8x1xf32, #tpu.memory_space<vmem>>, %arg8: memref<1x4xf32, #tpu.memory_space<vmem>>, %arg9: memref<4x128xf32, #tpu.memory_space<vmem>>, %arg10: memref<1x128xf32, #tpu.memory_space<vmem>>, %arg11: memref<2x8x128xf32, #tpu.memory_space<vmem>>) attributes {dimension_semantics = [#tpu.dimension_semantics<parallel>, #tpu.dimension_semantics<parallel>], iteration_bounds = array<i64: 2, 1>, scalar_prefetch = 0 : i64, scratch_operands = 0 : i64, tpu.core_type = #tpu.core_type<tc>, window_params = [{transform_indices = @transform_0, window_bounds = array<i64: 2, 8, 16>}, {transform_indices = @transform_1, window_bounds = array<i64: 2, 16, 8>}, {transform_indices = @transform_2, window_bounds = array<i64: 2, 4, 8>}, {transform_indices = @transform_3, window_bounds = array<i64: 2, 1, 8>}, {transform_indices = @transform_4, window_bounds = array<i64: 2, 4, 8>}, {transform_indices = @transform_5, window_bounds = array<i64: 8, 1>}, {pipeline_mode = #tpu.pipeline_mode<synchronous>, transform_indices = @transform_6, window_bounds = array<i64: 1, 4>}, {pipeline_mode = #tpu.pipeline_mode<synchronous>, transform_indices = @transform_7, window_bounds = array<i64: 4, 128>}, {pipeline_mode = #tpu.pipeline_mode<synchronous>, transform_indices = @transform_8, window_bounds = array<i64: 1, 128>}, {transform_indices = @transform_9, window_bounds = array<i64: 2, 8, 128>}]} {
    %c0 = arith.constant 0 : index
    %c0_0 = arith.constant 0 : index
    %c0_1 = arith.constant 0 : index
    %0 = vector.load %arg2[%c0, %c0_0, %c0_1] : memref<2x8x16xf32, #tpu.memory_space<vmem>>, vector<2x8x16xf32>
    %c0_2 = arith.constant 0 : index
    %c0_3 = arith.constant 0 : index
    %c0_4 = arith.constant 0 : index
    %1 = vector.load %arg3[%c0_2, %c0_3, %c0_4] : memref<2x16x8xf32, #tpu.memory_space<vmem>>, vector<2x16x8xf32>
    %cst = arith.constant dense<0.000000e+00> : vector<2x8x8xf32>
    %2 = tpu.matmul %0, %1, %cst {dimension_numbers = #tpu.dot_dimension_numbers<[2], [1], [1], [2], [0, 0, 0, 1, 1, 2], [0], [0]>} : vector<2x8x16xf32>, vector<2x16x8xf32>, vector<2x8x8xf32> -> vector<2x8x8xf32>
    %cst_5 = arith.constant 2.500000e-01 : f32
    %3 = vector.broadcast %cst_5 : f32 to vector<2x8x8xf32>
    %4 = arith.mulf %2, %3 : vector<2x8x8xf32>
    %c0_6 = arith.constant 0 : index
    %c0_7 = arith.constant 0 : index
    %5 = vector.load %arg7[%c0_6, %c0_7] : memref<8x1xf32, #tpu.memory_space<vmem>>, vector<8x1xf32>
    %6 = vector.shape_cast %5 : vector<8x1xf32> to vector<1x8x1x1xf32>
    %c0_8 = arith.constant 0 : index
    %c0_9 = arith.constant 0 : index
    %7 = vector.load %arg8[%c0_8, %c0_9] : memref<1x4xf32, #tpu.memory_space<vmem>>, vector<1x4xf32>
    %8 = vector.shape_cast %7 : vector<1x4xf32> to vector<1x1x4x1xf32>
    %9 = vector.broadcast %6 : vector<1x8x1x1xf32> to vector<1x8x4x1xf32>
    %10 = vector.broadcast %8 : vector<1x1x4x1xf32> to vector<1x8x4x1xf32>
    %11 = arith.addf %9, %10 : vector<1x8x4x1xf32>
    %12 = vector.broadcast %6 : vector<1x8x1x1xf32> to vector<1x8x4x1xf32>
    %13 = vector.broadcast %8 : vector<1x1x4x1xf32> to vector<1x8x4x1xf32>
    %14 = arith.subf %12, %13 : vector<1x8x4x1xf32>
    %c0_10 = arith.constant 0 : index
    %c0_11 = arith.constant 0 : index
    %c0_12 = arith.constant 0 : index
    %15 = vector.load %arg5[%c0_10, %c0_11, %c0_12] : memref<2x1x8xf32, #tpu.memory_space<vmem>>, vector<2x1x8xf32>
    %16 = vector.shape_cast %15 : vector<2x1x8xf32> to vector<2x1x1x8xf32>
    %c0_13 = arith.constant 0 : index
    %c0_14 = arith.constant 0 : index
    %c0_15 = arith.constant 0 : index
    %17 = vector.load %arg6[%c0_13, %c0_14, %c0_15] : memref<2x4x8xi8, #tpu.memory_space<vmem>>, vector<2x4x8xi8>
    %c0_i8 = arith.constant 0 : i8
    %18 = vector.broadcast %c0_i8 : i8 to vector<2x4x8xi8>
    %19 = arith.cmpi ne, %17, %18 : vector<2x4x8xi8>
    %20 = vector.shape_cast %19 : vector<2x4x8xi1> to vector<2x1x4x8xi1>
    %21 = vector.broadcast %16 : vector<2x1x1x8xf32> to vector<2x8x4x8xf32>
    %22 = vector.broadcast %11 : vector<1x8x4x1xf32> to vector<2x8x4x8xf32>
    %23 = arith.cmpf ole, %21, %22 : vector<2x8x4x8xf32>
    %24 = vector.broadcast %16 : vector<2x1x1x8xf32> to vector<2x8x4x8xf32>
    %25 = vector.broadcast %14 : vector<1x8x4x1xf32> to vector<2x8x4x8xf32>
    %26 = arith.cmpf oge, %24, %25 : vector<2x8x4x8xf32>
    %27 = arith.andi %23, %26 : vector<2x8x4x8xi1>
    %28 = vector.broadcast %20 : vector<2x1x4x8xi1> to vector<2x8x4x8xi1>
    %29 = arith.andi %27, %28 : vector<2x8x4x8xi1>
    %30 = vector.shape_cast %4 : vector<2x8x8xf32> to vector<2x8x1x8xf32>
    %31 = vector.shape_cast %30 : vector<2x8x1x8xf32> to vector<2x8x1x8xf32>
    %32 = vector.broadcast %31 : vector<2x8x1x8xf32> to vector<2x8x4x8xf32>
    %cst_16 = arith.constant -1.000000e+09 : f32
    %33 = vector.broadcast %cst_16 : f32 to vector<2x8x4x8xf32>
    %34 = arith.select %29, %32, %33 : vector<2x8x4x8xi1>, vector<2x8x4x8xf32>
    %cst_17 = arith.constant dense<0xFF800000> : vector<2x8x4xf32>
    %35 = vector.multi_reduction <maximumf>, %34, %cst_17 [3] : vector<2x8x4x8xf32> to vector<2x8x4xf32>
    %36 = vector.shape_cast %35 : vector<2x8x4xf32> to vector<2x8x4x1xf32>
    %37 = vector.broadcast %36 : vector<2x8x4x1xf32> to vector<2x8x4x8xf32>
    %38 = arith.subf %34, %37 : vector<2x8x4x8xf32>
    %39 = math.exp %38 : vector<2x8x4x8xf32>
    %cst_18 = arith.constant dense<0.000000e+00> : vector<2x8x4xf32>
    %40 = vector.multi_reduction <add>, %39, %cst_18 [3] : vector<2x8x4x8xf32> to vector<2x8x4xf32>
    %c0_19 = arith.constant 0 : index
    %c0_20 = arith.constant 0 : index
    %c0_21 = arith.constant 0 : index
    %41 = vector.load %arg4[%c0_19, %c0_20, %c0_21] : memref<2x4x8xf32, #tpu.memory_space<vmem>>, vector<2x4x8xf32>
    %42 = vector.shape_cast %41 : vector<2x4x8xf32> to vector<2x1x4x8xf32>
    %43 = vector.broadcast %42 : vector<2x1x4x8xf32> to vector<2x8x4x8xf32>
    %44 = arith.mulf %39, %43 : vector<2x8x4x8xf32>
    %cst_22 = arith.constant dense<0.000000e+00> : vector<2x8x4xf32>
    %45 = vector.multi_reduction <add>, %44, %cst_22 [3] : vector<2x8x4x8xf32> to vector<2x8x4xf32>
    %46 = arith.divf %45, %40 : vector<2x8x4xf32>
    %47 = vector.shape_cast %46 : vector<2x8x4xf32> to vector<16x4xf32>
    %c0_23 = arith.constant 0 : index
    %c0_24 = arith.constant 0 : index
    %48 = vector.load %arg9[%c0_23, %c0_24] : memref<4x128xf32, #tpu.memory_space<vmem>>, vector<4x128xf32>
    %cst_25 = arith.constant dense<0.000000e+00> : vector<16x128xf32>
    %49 = tpu.matmul %47, %48, %cst_25 {dimension_numbers = #tpu.dot_dimension_numbers<[1], [0], [0], [1], [0, 0, 1, 1], [], []>} : vector<16x4xf32>, vector<4x128xf32>, vector<16x128xf32> -> vector<16x128xf32>
    %c0_26 = arith.constant 0 : index
    %c0_27 = arith.constant 0 : index
    %50 = vector.load %arg10[%c0_26, %c0_27] : memref<1x128xf32, #tpu.memory_space<vmem>>, vector<1x128xf32>
    %51 = vector.broadcast %50 : vector<1x128xf32> to vector<16x128xf32>
    %52 = arith.addf %49, %51 : vector<16x128xf32>
    %53 = vector.shape_cast %52 : vector<16x128xf32> to vector<2x8x128xf32>
    %c0_28 = arith.constant 0 : index
    %c0_29 = arith.constant 0 : index
    %c0_30 = arith.constant 0 : index
    %54 = vector.load %arg11[%c0_28, %c0_29, %c0_30] : memref<2x8x128xf32, #tpu.memory_space<vmem>>, vector<2x8x128xf32>
    tpu.vector_store %arg11[%c0_28, %c0_29, %c0_30], %53 {strides = array<i32>} : memref<2x8x128xf32, #tpu.memory_space<vmem>>, vector<2x8x128xf32>,
    return
  }
  func.func @transform_0(%arg0: i32, %arg1: i32) -> (i32, i32, i32) {
    %c0_i32 = arith.constant 0 : i32
    %c0_i32_0 = arith.constant 0 : i32
    return %arg0, %arg1, %c0_i32 : i32, i32, i32
  }
  func.func @transform_1(%arg0: i32, %arg1: i32) -> (i32, i32, i32) {
    %c0_i32 = arith.constant 0 : i32
    %c0_i32_0 = arith.constant 0 : i32
    %c0_i32_1 = arith.constant 0 : i32
    return %arg0, %c0_i32, %c0_i32_0 : i32, i32, i32
  }
  func.func @transform_2(%arg0: i32, %arg1: i32) -> (i32, i32, i32) {
    %c0_i32 = arith.constant 0 : i32
    %c0_i32_0 = arith.constant 0 : i32
    %c0_i32_1 = arith.constant 0 : i32
    return %arg0, %c0_i32, %c0_i32_0 : i32, i32, i32
  }
  func.func @transform_3(%arg0: i32, %arg1: i32) -> (i32, i32, i32) {
    %c0_i32 = arith.constant 0 : i32
    %c0_i32_0 = arith.constant 0 : i32
    %c0_i32_1 = arith.constant 0 : i32
    return %arg0, %c0_i32, %c0_i32_0 : i32, i32, i32
  }
  func.func @transform_4(%arg0: i32, %arg1: i32) -> (i32, i32, i32) {
    %c0_i32 = arith.constant 0 : i32
    %c0_i32_0 = arith.constant 0 : i32
    %c0_i32_1 = arith.constant 0 : i32
    return %arg0, %c0_i32, %c0_i32_0 : i32, i32, i32
  }
  func.func @transform_5(%arg0: i32, %arg1: i32) -> (i32, i32) {
    %c0_i32 = arith.constant 0 : i32
    %c0_i32_0 = arith.constant 0 : i32
    return %arg1, %c0_i32 : i32, i32
  }
  func.func @transform_6(%arg0: i32, %arg1: i32) -> (i32, i32) {
    %c0_i32 = arith.constant 0 : i32
    %c0_i32_0 = arith.constant 0 : i32
    %c0_i32_1 = arith.constant 0 : i32
    return %c0_i32, %c0_i32_0 : i32, i32
  }
  func.func @transform_7(%arg0: i32, %arg1: i32) -> (i32, i32) {
    %c0_i32 = arith.constant 0 : i32
    %c0_i32_0 = arith.constant 0 : i32
    %c0_i32_1 = arith.constant 0 : i32
    return %c0_i32, %c0_i32_0 : i32, i32
  }
  func.func @transform_8(%arg0: i32, %arg1: i32) -> (i32, i32) {
    %c0_i32 = arith.constant 0 : i32
    %c0_i32_0 = arith.constant 0 : i32
    %c0_i32_1 = arith.constant 0 : i32
    return %c0_i32, %c0_i32_0 : i32, i32
  }
  func.func @transform_9(%arg0: i32, %arg1: i32) -> (i32, i32, i32) {
    %c0_i32 = arith.constant 0 : i32
    %c0_i32_0 = arith.constant 0 : i32
    return %arg0, %arg1, %c0_i32 : i32, i32, i32
  }
}

</mosaic_0001>

<llo_original>
// kernel: tpu_custom_call.1
$region0: #{tpu_custom_call.1}
  #allocation0 [shape = 'u32[]', space=smem, size = 0x4, offset = 0x4, fixed_abs, tag = 'smem constant byte address 0x4 - core index']
  #allocation1 [shape = 'u32[144,128]{1,0:T(1,128)}', space=vmem, size = 0x12000, scoped, tag = 'internal scratch']
  %s0 = inlined_call_operand.vmem [shape: f32[4,8,16], index: 0, kind: input, shape index: {}]
  %s1 = inlined_call_operand.vmem [shape: f32[4,16,8], index: 1, kind: input, shape index: {}]
  %s2 = inlined_call_operand.vmem [shape: f32[4,4,8], index: 2, kind: input, shape index: {}]
  %s3 = inlined_call_operand.vmem [shape: f32[4,1,8], index: 3, kind: input, shape index: {}]
  %s4 = inlined_call_operand.vmem [shape: s8[4,4,8], index: 4, kind: input, shape index: {}]
  %s5 = inlined_call_operand.vmem [shape: f32[8,1], index: 5, kind: input, shape index: {}]
  %s6 = inlined_call_operand.vmem [shape: f32[1,4], index: 6, kind: input, shape index: {}]
  %s7 = inlined_call_operand.vmem [shape: f32[4,128], index: 7, kind: input, shape index: {}]
  %s8 = inlined_call_operand.vmem [shape: f32[1,128], index: 8, kind: input, shape index: {}]
  %s9 = inlined_call_operand.hbm [shape: f32[4,8,128], index: 9, kind: output, shape index: {}]
  %s10 = sld [smem:[#allocation0]]
  $region69: #{tpu_custom_call.1} parent=0
    _
  %s12 = ssub.s32 1, %s10
  %s13 = scalar_select 0, %s12, %s10
  $region1: #{tpu_custom_call.1} parent=0
    #allocation2 [shape = 'u8[16384]{0}', space=vmem, size = 0x4000, scoped, tag = 'output window, operand 0']
    #allocation3 [shape = 's32[2]{0}', space=sflag, size = 0x8, scoped, tag = 'scoped memory for tpu_custom_call.1']
    %14 = vsyncpa [#allocation3], 0
    %s15 = scalar_lea.sflag [#allocation3], 1
    %16 = vsyncpa %s15, 0
    loop: start=0, step=1, limit=4
    $region2: #{tpu_custom_call.1} parent=1 // loop_pre_header
      _
    $region3: #{tpu_custom_call.1} parent=1 // loop_header
      %s18 = sphi 0, %s22
      %p19 = scmp.ge.s32.totalorder %s18, 4
      %s25 = sphi 0, %s37
      %s26 = sphi 0, %s33
      %s27 = sphi 0, %s25
      %s28 = sphi 0, %s26
      %s29 = sphi 0, %s27
      %s30 = sphi 0, %s28
      %s42 = sphi 0, %s44
      %s45 = sphi 0, %s42
      %s46 = sphi 0, %s45
      %s62 = sphi 0, %s46
      %s68 = sphi 0, %s70
      %s71 = sphi 0, %s68
      %s72 = sphi 0, %s71
      %s88 = sphi 0, %s72
      %s94 = sphi 0, %s96
      %s97 = sphi 0, %s94
      %s98 = sphi 0, %s97
      %s114 = sphi 0, %s98
      %s120 = sphi 0, %s122
      %s123 = sphi 0, %s120
      %s124 = sphi 0, %s123
      %s140 = sphi 0, %s124
      %s146 = sphi 0, %s148
      %s149 = sphi 0, %s146
      %s150 = sphi 0, %s149
      %s166 = sphi 0, %s150
      %s172 = sphi 0, %s174
      %s175 = sphi 0, %s172
      %s176 = sphi 0, %s175
      %s192 = sphi 0, %s176
      %s196 = sphi 0, %s196
      %s198 = sphi 0, %s196
      %s199 = sphi 0, %s198
      %s213 = sphi 0, %s199
      %s217 = sphi 0, %s217
      %s219 = sphi 0, %s217
      %s220 = sphi 0, %s219
      %s234 = sphi 0, %s220
      %s238 = sphi 0, %s238
      %s240 = sphi 0, %s238
      %s241 = sphi 0, %s240
      %s255 = sphi 0, %s241
      %s263 = sphi 0, %s265
      %s266 = sphi 0, %s263
      %s267 = sphi 0, %s266
      %s283 = sphi 0, %s267
    $region4: #{tpu_custom_call.1} parent=1 // loop_header_branch
      %21 = sbr.rel (%p19) target = $region8
    $region5: #{tpu_custom_call.1} parent=1 // loop_body
      %s23 = ssub.s32 %s18, 1
      %s24 = ssub.s32 %s18, 2
      %s31 = sadd.s32 1, %s26
      %p32 = scmp.ge.s32.totalorder %s31, 1
      %s33 = scalar_select %p32, 0, %s31
      %s34 = sadd.s32 1, %s25
      %s35 = scalar_select %p32, %s34, %s25
      %p36 = scmp.ge.s32.totalorder %s35, 2
      %s37 = scalar_select %p36, 0, %s35
      %s38 = ssub.s32 %s25, %s37
      %s39 = ssub.s32 %s26, %s33
      %s40 = sor.u32 %s38, %s39
      %p41 = scmp.eq.s32.totalorder %s40, 0
      %s43 = sadd.s32 %s42, 1
      %s44 = scalar_select %p41, %s42, %s43
      %p47 = pneg %p41
      %p48 = scmp.eq.s32.totalorder %s18, 1
      %p49 = por %p47, %p48
      %p50 = scmp.ne.s32.totalorder %s42, %s45
      %p51 = scmp.eq.s32.totalorder %s18, 0
      %p52 = por %p50, %p51
      %p53 = scmp.ne.s32.totalorder %s42, %s45
      %p54 = scmp.eq.s32.totalorder %s23, 1
      %p55 = por %p53, %p54
      %p56 = scmp.ne.s32.totalorder %s45, %s46
      %p57 = scmp.eq.s32.totalorder %s23, 0
      %p58 = por %p56, %p57
      %p59 = scmp.ne.s32.totalorder %s45, %s46
      %p60 = scmp.eq.s32.totalorder %s24, 1
      %p61 = por %p59, %p60
      %p63 = scmp.ne.s32.totalorder %s46, %s62
      %p64 = scmp.eq.s32.totalorder %s24, 0
      %p65 = por %p63, %p64
      %s66 = ssub.s32 %s25, %s37
      %p67 = scmp.eq.s32.totalorder %s66, 0
      %s69 = sadd.s32 %s68, 1
      %s70 = scalar_select %p67, %s68, %s69
      %p73 = pneg %p67
      %p74 = scmp.eq.s32.totalorder %s18, 1
      %p75 = por %p73, %p74
      %p76 = scmp.ne.s32.totalorder %s68, %s71
      %p77 = scmp.eq.s32.totalorder %s18, 0
      %p78 = por %p76, %p77
      %p79 = scmp.ne.s32.totalorder %s68, %s71
      %p80 = scmp.eq.s32.totalorder %s23, 1
      %p81 = por %p79, %p80
      %p82 = scmp.ne.s32.totalorder %s71, %s72
      %p83 = scmp.eq.s32.totalorder %s23, 0
      %p84 = por %p82, %p83
      %p85 = scmp.ne.s32.totalorder %s71, %s72
      %p86 = scmp.eq.s32.totalorder %s24, 1
      %p87 = por %p85, %p86
      %p89 = scmp.ne.s32.totalorder %s72, %s88
      %p90 = scmp.eq.s32.totalorder %s24, 0
      %p91 = por %p89, %p90
      %s92 = ssub.s32 %s25, %s37
      %p93 = scmp.eq.s32.totalorder %s92, 0
      %s95 = sadd.s32 %s94, 1
      %s96 = scalar_select %p93, %s94, %s95
      %p99 = pneg %p93
      %p100 = scmp.eq.s32.totalorder %s18, 1
      %p101 = por %p99, %p100
      %p102 = scmp.ne.s32.totalorder %s94, %s97
      %p103 = scmp.eq.s32.totalorder %s18, 0
      %p104 = por %p102, %p103
      %p105 = scmp.ne.s32.totalorder %s94, %s97
      %p106 = scmp.eq.s32.totalorder %s23, 1
      %p107 = por %p105, %p106
      %p108 = scmp.ne.s32.totalorder %s97, %s98
      %p109 = scmp.eq.s32.totalorder %s23, 0
      %p110 = por %p108, %p109
      %p111 = scmp.ne.s32.totalorder %s97, %s98
      %p112 = scmp.eq.s32.totalorder %s24, 1
      %p113 = por %p111, %p112
      %p115 = scmp.ne.s32.totalorder %s98, %s114
      %p116 = scmp.eq.s32.totalorder %s24, 0
      %p117 = por %p115, %p116
      %s118 = ssub.s32 %s25, %s37
      %p119 = scmp.eq.s32.totalorder %s118, 0
      %s121 = sadd.s32 %s120, 1
      %s122 = scalar_select %p119, %s120, %s121
      %p125 = pneg %p119
      %p126 = scmp.eq.s32.totalorder %s18, 1
      %p127 = por %p125, %p126
      %p128 = scmp.ne.s32.totalorder %s120, %s123
      %p129 = scmp.eq.s32.totalorder %s18, 0
      %p130 = por %p128, %p129
      %p131 = scmp.ne.s32.totalorder %s120, %s123
      %p132 = scmp.eq.s32.totalorder %s23, 1
      %p133 = por %p131, %p132
      %p134 = scmp.ne.s32.totalorder %s123, %s124
      %p135 = scmp.eq.s32.totalorder %s23, 0
      %p136 = por %p134, %p135
      %p137 = scmp.ne.s32.totalorder %s123, %s124
      %p138 = scmp.eq.s32.totalorder %s24, 1
      %p139 = por %p137, %p138
      %p141 = scmp.ne.s32.totalorder %s124, %s140
      %p142 = scmp.eq.s32.totalorder %s24, 0
      %p143 = por %p141, %p142
      %s144 = ssub.s32 %s25, %s37
      %p145 = scmp.eq.s32.totalorder %s144, 0
      %s147 = sadd.s32 %s146, 1
      %s148 = scalar_select %p145, %s146, %s147
      %p151 = pneg %p145
      %p152 = scmp.eq.s32.totalorder %s18, 1
      %p153 = por %p151, %p152
      %p154 = scmp.ne.s32.totalorder %s146, %s149
      %p155 = scmp.eq.s32.totalorder %s18, 0
      %p156 = por %p154, %p155
      %p157 = scmp.ne.s32.totalorder %s146, %s149
      %p158 = scmp.eq.s32.totalorder %s23, 1
      %p159 = por %p157, %p158
      %p160 = scmp.ne.s32.totalorder %s149, %s150
      %p161 = scmp.eq.s32.totalorder %s23, 0
      %p162 = por %p160, %p161
      %p163 = scmp.ne.s32.totalorder %s149, %s150
      %p164 = scmp.eq.s32.totalorder %s24, 1
      %p165 = por %p163, %p164
      %p167 = scmp.ne.s32.totalorder %s150, %s166
      %p168 = scmp.eq.s32.totalorder %s24, 0
      %p169 = por %p167, %p168
      %s170 = ssub.s32 %s26, %s33
      %p171 = scmp.eq.s32.totalorder %s170, 0
      %s173 = sadd.s32 %s172, 1
      %s174 = scalar_select %p171, %s172, %s173
      %p177 = pneg %p171
      %p178 = scmp.eq.s32.totalorder %s18, 1
      %p179 = por %p177, %p178
      %p180 = scmp.ne.s32.totalorder %s172, %s175
      %p181 = scmp.eq.s32.totalorder %s18, 0
      %p182 = por %p180, %p181
      %p183 = scmp.ne.s32.totalorder %s172, %s175
      %p184 = scmp.eq.s32.totalorder %s23, 1
      %p185 = por %p183, %p184
      %p186 = scmp.ne.s32.totalorder %s175, %s176
      %p187 = scmp.eq.s32.totalorder %s23, 0
      %p188 = por %p186, %p187
      %p189 = scmp.ne.s32.totalorder %s175, %s176
      %p190 = scmp.eq.s32.totalorder %s24, 1
      %p191 = por %p189, %p190
      %p193 = scmp.ne.s32.totalorder %s176, %s192
      %p194 = scmp.eq.s32.totalorder %s24, 0
      %p195 = por %p193, %p194
      %s197 = sadd.s32 %s196, 1
      %p200 = scmp.eq.s32.totalorder %s18, 1
      %p201 = scmp.ne.s32.totalorder %s196, %s198
      %p202 = scmp.eq.s32.totalorder %s18, 0
      %p203 = por %p201, %p202
      %p204 = scmp.ne.s32.totalorder %s196, %s198
      %p205 = scmp.eq.s32.totalorder %s23, 1
      %p206 = por %p204, %p205
      %p207 = scmp.ne.s32.totalorder %s198, %s199
      %p208 = scmp.eq.s32.totalorder %s23, 0
      %p209 = por %p207, %p208
      %p210 = scmp.ne.s32.totalorder %s198, %s199
      %p211 = scmp.eq.s32.totalorder %s24, 1
      %p212 = por %p210, %p211
      %p214 = scmp.ne.s32.totalorder %s199, %s213
      %p215 = scmp.eq.s32.totalorder %s24, 0
      %p216 = por %p214, %p215
      %s218 = sadd.s32 %s217, 1
      %p221 = scmp.eq.s32.totalorder %s18, 1
      %p222 = scmp.ne.s32.totalorder %s217, %s219
      %p223 = scmp.eq.s32.totalorder %s18, 0
      %p224 = por %p222, %p223
      %p225 = scmp.ne.s32.totalorder %s217, %s219
      %p226 = scmp.eq.s32.totalorder %s23, 1
      %p227 = por %p225, %p226
      %p228 = scmp.ne.s32.totalorder %s219, %s220
      %p229 = scmp.eq.s32.totalorder %s23, 0
      %p230 = por %p228, %p229
      %p231 = scmp.ne.s32.totalorder %s219, %s220
      %p232 = scmp.eq.s32.totalorder %s24, 1
      %p233 = por %p231, %p232
      %p235 = scmp.ne.s32.totalorder %s220, %s234
      %p236 = scmp.eq.s32.totalorder %s24, 0
      %p237 = por %p235, %p236
      %s239 = sadd.s32 %s238, 1
      %p242 = scmp.eq.s32.totalorder %s18, 1
      %p243 = scmp.ne.s32.totalorder %s238, %s240
      %p244 = scmp.eq.s32.totalorder %s18, 0
      %p245 = por %p243, %p244
      %p246 = scmp.ne.s32.totalorder %s238, %s240
      %p247 = scmp.eq.s32.totalorder %s23, 1
      %p248 = por %p246, %p247
      %p249 = scmp.ne.s32.totalorder %s240, %s241
      %p250 = scmp.eq.s32.totalorder %s23, 0
      %p251 = por %p249, %p250
      %p252 = scmp.ne.s32.totalorder %s240, %s241
      %p253 = scmp.eq.s32.totalorder %s24, 1
      %p254 = por %p252, %p253
      %p256 = scmp.ne.s32.totalorder %s241, %s255
      %p257 = scmp.eq.s32.totalorder %s24, 0
      %p258 = por %p256, %p257
      %s259 = ssub.s32 %s25, %s37
      %s260 = ssub.s32 %s26, %s33
      %s261 = sor.u32 %s259, %s260
      %p262 = scmp.eq.s32.totalorder %s261, 0
      %s264 = sadd.s32 %s263, 1
      %s265 = scalar_select %p262, %s263, %s264
      %p268 = pneg %p262
      %p269 = scmp.eq.s32.totalorder %s18, 1
      %p270 = por %p268, %p269
      %p271 = scmp.ne.s32.totalorder %s263, %s266
      %p272 = scmp.eq.s32.totalorder %s18, 0
      %p273 = por %p271, %p272
      %p274 = scmp.ne.s32.totalorder %s263, %s266
      %p275 = scmp.eq.s32.totalorder %s23, 1
      %p276 = por %p274, %p275
      %p277 = scmp.ne.s32.totalorder %s266, %s267
      %p278 = scmp.eq.s32.totalorder %s23, 0
      %p279 = por %p277, %p278
      %p280 = scmp.ne.s32.totalorder %s266, %s267
      %p281 = scmp.eq.s32.totalorder %s24, 1
      %p282 = por %p280, %p281
      %p284 = scmp.ne.s32.totalorder %s267, %s283
      %p285 = scmp.eq.s32.totalorder %s24, 0
      %p286 = por %p284, %p285
      %p287 = scmp.le.s32.totalorder 1, %s18
      %p288 = scmp.lt.s32.totalorder %s18, 3
      %p289 = pnand %p287, %p288
      %p290 = pneg %p289
      // Predicated region
      $region9: #{tpu_custom_call.1} parent=5 // pred_check
        _
      $region10: #{tpu_custom_call.1} parent=5 // pred_check_branch
        %292 = sbr.rel (%p289) target = $region12
      $region11: #{tpu_custom_call.1} parent=5 // pred_region
        %s293 = ssub.s32 %s18, 1
        // Predicated region
        $region13: #{tpu_custom_call.1} parent=11 // pred_check
          %p294 = pneg %p188
        $region14: #{tpu_custom_call.1} parent=11 // pred_check_branch
          %296 = sbr.rel (%p294) target = $region16
        $region15: #{tpu_custom_call.1} parent=11 // pred_region
          %p297 = scmp.lt.s32.totalorder %s28, 0
          %s298 = scalar_select %p297, %s28, 0
          %s299 = smul.addr %s298, 8
          %s300 = scalar_lea.vmem %s5, %s299
        $region16: #{tpu_custom_call.1} parent=11 // pred_fallthru
          _
        // Predicated region
        $region17: #{tpu_custom_call.1} parent=11 // pred_check
          %p301 = pneg %p209
        $region18: #{tpu_custom_call.1} parent=11 // pred_check_branch
          %303 = sbr.rel (%p301) target = $region20
        $region19: #{tpu_custom_call.1} parent=11 // pred_region
          _
        $region20: #{tpu_custom_call.1} parent=11 // pred_fallthru
          _
        // Predicated region
        $region21: #{tpu_custom_call.1} parent=11 // pred_check
          %p304 = pneg %p230
        $region22: #{tpu_custom_call.1} parent=11 // pred_check_branch
          %306 = sbr.rel (%p304) target = $region24
        $region23: #{tpu_custom_call.1} parent=11 // pred_region
          _
        $region24: #{tpu_custom_call.1} parent=11 // pred_fallthru
          _
        // Predicated region
        $region25: #{tpu_custom_call.1} parent=11 // pred_check
          %p307 = pneg %p251
        $region26: #{tpu_custom_call.1} parent=11 // pred_check_branch
          %309 = sbr.rel (%p307) target = $region28
        $region27: #{tpu_custom_call.1} parent=11 // pred_region
          _
        $region28: #{tpu_custom_call.1} parent=11 // pred_fallthru
          _
      $region12: #{tpu_custom_call.1} parent=5 // pred_fallthru
        _
      %p310 = scmp.lt.s32.totalorder %s18, 2
      // Predicated region
      $region29: #{tpu_custom_call.1} parent=5 // pred_check
        %p311 = pneg %p310
      $region30: #{tpu_custom_call.1} parent=5 // pred_check_branch
        %313 = sbr.rel (%p311) target = $region32
      $region31: #{tpu_custom_call.1} parent=5 // pred_region
        // Predicated region
        $region33: #{tpu_custom_call.1} parent=31 // pred_check
          %p314 = pneg %p52
        $region34: #{tpu_custom_call.1} parent=31 // pred_check_branch
          %316 = sbr.rel (%p314) target = $region36
        $region35: #{tpu_custom_call.1} parent=31 // pred_region
          %s317 = smul.u32 2, %s25
          %p318 = scmp.lt.s32.totalorder %s317, 3
          %s319 = scalar_select %p318, %s317, 3
          %p320 = scmp.lt.s32.totalorder %s26, 0
          %s321 = scalar_select %p320, %s26, 0
          %s322 = sadd.s32 %s321, %s319
          %s323 = smul.addr %s322, 8
          %s324 = scalar_lea.vmem %s0, %s323
          %s325 = smul.u32 2, %s25
        $region36: #{tpu_custom_call.1} parent=31 // pred_fallthru
          _
        // Predicated region
        $region37: #{tpu_custom_call.1} parent=31 // pred_check
          %p326 = pneg %p78
        $region38: #{tpu_custom_call.1} parent=31 // pred_check_branch
          %328 = sbr.rel (%p326) target = $region40
        $region39: #{tpu_custom_call.1} parent=31 // pred_region
          %s329 = smul.u32 2, %s25
          %p330 = scmp.lt.s32.totalorder %s329, 3
          %s331 = scalar_select %p330, %s329, 3
          %s332 = smul.addr %s331, 2
          %s333 = smul.addr %s332, 8
          %s334 = scalar_lea.vmem %s1, %s333
          %s335 = smul.u32 2, %s25
        $region40: #{tpu_custom_call.1} parent=31 // pred_fallthru
          _
        // Predicated region
        $region41: #{tpu_custom_call.1} parent=31 // pred_check
          %p336 = pneg %p104
        $region42: #{tpu_custom_call.1} parent=31 // pred_check_branch
          %338 = sbr.rel (%p336) target = $region44
        $region43: #{tpu_custom_call.1} parent=31 // pred_region
          %s339 = smul.u32 2, %s25
          %p340 = scmp.lt.s32.totalorder %s339, 3
          %s341 = scalar_select %p340, %s339, 3
          %s342 = smul.addr %s341, 4
          %s343 = scalar_lea.vmem %s2, %s342
          %s344 = smul.u32 2, %s25
        $region44: #{tpu_custom_call.1} parent=31 // pred_fallthru
          _
        // Predicated region
        $region45: #{tpu_custom_call.1} parent=31 // pred_check
          %p345 = pneg %p130
        $region46: #{tpu_custom_call.1} parent=31 // pred_check_branch
          %347 = sbr.rel (%p345) target = $region48
        $region47: #{tpu_custom_call.1} parent=31 // pred_region
          %s348 = smul.u32 2, %s25
          %p349 = scmp.lt.s32.totalorder %s348, 3
          %s350 = scalar_select %p349, %s348, 3
          %s351 = scalar_lea.vmem %s3, %s350
          %s352 = smul.u32 2, %s25
        $region48: #{tpu_custom_call.1} parent=31 // pred_fallthru
          _
        // Predicated region
        $region49: #{tpu_custom_call.1} parent=31 // pred_check
          %p353 = pneg %p156
        $region50: #{tpu_custom_call.1} parent=31 // pred_check_branch
          %355 = sbr.rel (%p353) target = $region52
        $region51: #{tpu_custom_call.1} parent=31 // pred_region
          %s356 = smul.u32 2, %s25
          %p357 = scmp.lt.s32.totalorder %s356, 3
          %s358 = scalar_select %p357, %s356, 3
          %s359 = scalar_lea.vmem %s4, %s358
          %s360 = smul.u32 2, %s25
        $region52: #{tpu_custom_call.1} parent=31 // pred_fallthru
          _
      $region32: #{tpu_custom_call.1} parent=5 // pred_fallthru
        _
      %p361 = scmp.le.s32.totalorder 1, %s18
      %p362 = scmp.lt.s32.totalorder %s18, 3
      %p363 = pnand %p361, %p362
      %p364 = pneg %p363
      // Predicated region
      $region53: #{tpu_custom_call.1} parent=5 // pred_check
        _
      $region54: #{tpu_custom_call.1} parent=5 // pred_check_branch
        %366 = sbr.rel (%p363) target = $region56
      $region55: #{tpu_custom_call.1} parent=5 // pred_region
        %s367 = ssub.s32 %s18, 1
        %s368 = smul.u32 2, %s27
        %p369 = scmp.lt.s32.totalorder %s368, 3
        %s370 = scalar_select %p369, %s368, 3
        %p371 = scmp.lt.s32.totalorder %s28, 0
        %s372 = scalar_select %p371, %s28, 0
        %s373 = sadd.s32 %s372, %s370
        %s374 = smul.addr %s373, 8
        %s375 = scalar_lea.vmem %s0, %s374
        %p376 = pneg %p58
        %p377 = pneg %p55
        %s378 = smul.u32 2, %s27
        %p379 = scmp.lt.s32.totalorder %s378, 3
        %s380 = scalar_select %p379, %s378, 3
        %s381 = smul.addr %s380, 2
        %s382 = smul.addr %s381, 8
        %s383 = scalar_lea.vmem %s1, %s382
        %p384 = pneg %p84
        %p385 = pneg %p81
        %s386 = smul.u32 2, %s27
        %p387 = scmp.lt.s32.totalorder %s386, 3
        %s388 = scalar_select %p387, %s386, 3
        %s389 = smul.addr %s388, 4
        %s390 = scalar_lea.vmem %s2, %s389
        %p391 = pneg %p110
        %p392 = pneg %p107
        %s393 = smul.u32 2, %s27
        %p394 = scmp.lt.s32.totalorder %s393, 3
        %s395 = scalar_select %p394, %s393, 3
        %s396 = scalar_lea.vmem %s3, %s395
        %p397 = pneg %p136
        %p398 = pneg %p133
        %s399 = smul.u32 2, %s27
        %p400 = scmp.lt.s32.totalorder %s399, 3
        %s401 = scalar_select %p400, %s399, 3
        %s402 = scalar_lea.vmem %s4, %s401
        %p403 = pneg %p162
        %p404 = pneg %p159
        %p405 = scmp.lt.s32.totalorder %s28, 0
        %s406 = scalar_select %p405, %s28, 0
        %s407 = smul.addr %s406, 8
        %s408 = scalar_lea.vmem %s5, %s407
        %p409 = pneg %p188
        %p410 = pneg %p185
        %p411 = pneg %p209
        %p412 = pneg %p206
        %p413 = pneg %p230
        %p414 = pneg %p227
        %p415 = pneg %p251
        %p416 = pneg %p248
        %p417 = pneg %p279
        %p418 = pneg %p276
        %s419 = sand.u32 %s266, 1
        %s420 = scalar_lea.sflag [#allocation3], %s419
        %s421 = sand.u32 %s266, 1
        %s422 = smul.addr %s421, 16
        %s423 = scalar_lea.vmem [#allocation2], %s422
        %s424 = smul.u32 2, %s27
        %p425 = scmp.lt.s32.totalorder %s424, 3
        %s426 = scalar_select %p425, %s424, 3
        %p427 = scmp.lt.s32.totalorder %s28, 0
        %s428 = scalar_select %p427, %s28, 0
        %s429 = sadd.s32 %s428, %s426
        %s430 = smul.addr %s429, 8
        %s431 = scalar_lea.vmem %s0, %s430
        %s432 = smul.u32 2, %s27
        %s433 = smul.u32 2, %s27
        %p434 = scmp.lt.s32.totalorder %s433, 3
        %s435 = scalar_select %p434, %s433, 3
        %s436 = smul.addr %s435, 2
        %s437 = smul.addr %s436, 8
        %s438 = scalar_lea.vmem %s1, %s437
        %s439 = smul.u32 2, %s27
        %s440 = smul.u32 2, %s27
        %p441 = scmp.lt.s32.totalorder %s440, 3
        %s442 = scalar_select %p441, %s440, 3
        %s443 = smul.addr %s442, 4
        %s444 = scalar_lea.vmem %s2, %s443
        %s445 = smul.u32 2, %s27
        %s446 = smul.u32 2, %s27
        %p447 = scmp.lt.s32.totalorder %s446, 3
        %s448 = scalar_select %p447, %s446, 3
        %s449 = scalar_lea.vmem %s3, %s448
        %s450 = smul.u32 2, %s27
        %s451 = smul.u32 2, %s27
        %p452 = scmp.lt.s32.totalorder %s451, 3
        %s453 = scalar_select %p452, %s451, 3
        %s454 = scalar_lea.vmem %s4, %s453
        %s455 = smul.u32 2, %s27
        %p456 = scmp.lt.s32.totalorder %s28, 0
        %s457 = scalar_select %p456, %s28, 0
        %s458 = smul.addr %s457, 8
        %s459 = scalar_lea.vmem %s5, %s458
        %s460 = smul.u32 2, %s27
        %v463 = vld [vmem:[%s431] sm:$0xff]
        %v464 = vld [vmem:[%s431 + $0x8] sm:$0xff]
        %v465 = vld [vmem:[%s438] sm:$0xff]
        %v466 = vld [vmem:[%s438 + $0x8] sm:$0xff]
        %v467 = vld [vmem:[%s438 + $0x10] sm:$0xff]
        %v468 = vld [vmem:[%s438 + $0x18] sm:$0xff]
        %vm469 = vcmask 130048
        %v471 = vsel %vm469, %v463, 0
        %473 = vmatprep.subr.mxu0 0.0
        %474 = vmatpush1.msra.mxu0 %v465
        %475 = vmatprep.subr.mxu0 0.0
        %476 = vmatpush1.msra.mxu0 %v466
        %477 = vmatprep.subr.mxu0 0.0
        %478 = vmatpush1.msra.mxu0 0.0
        %479 = vmatprep.subr.mxu0 0.0
        %480 = vmatpush1.msra.mxu0 0.0
        %481 = vmatprep.subr.mxu0 0.0
        %482 = vmatpush1.msra.mxu0 0.0
        %483 = vmatprep.subr.mxu0 0.0
        %484 = vmatpush1.msra.mxu0 0.0
        %485 = vmatprep.subr.mxu0 0.0
        %486 = vmatpush1.msra.mxu0 0.0
        %487 = vmatprep.subr.mxu0 0.0
        %488 = vmatpush1.msra.mxu0 0.0
        %489 = vmatprep.subr.mxu0 0.0
        %490 = vmatpush1.msra.mxu0 0.0
        %491 = vmatprep.subr.mxu0 0.0
        %492 = vmatpush1.msra.mxu0 0.0
        %493 = vmatprep.subr.mxu0 0.0
        %494 = vmatpush1.msra.mxu0 0.0
        %495 = vmatprep.subr.mxu0 0.0
        %496 = vmatpush1.msra.mxu0 0.0
        %497 = vmatprep.subr.mxu0 0.0
        %498 = vmatpush1.msra.mxu0 0.0
        %499 = vmatprep.subr.mxu0 0.0
        %500 = vmatpush1.msra.mxu0 0.0
        %501 = vmatprep.subr.mxu0 0.0
        %502 = vmatpush1.msra.mxu0 0.0
        %503 = vmatprep.subr.mxu0 0.0
        %504 = vmatpush1.msra.mxu0 0.0
        %505 = vmatprep.subr.mxu0 0.0
        %506 = vmatpush1.msra.mxu0 0.0
        %507 = vmatprep.subr.mxu0 0.0
        %508 = vmatpush1.msra.mxu0 0.0
        %509 = vmatprep.subr.mxu0 0.0
        %510 = vmatpush1.msra.mxu0 0.0
        %511 = vmatprep.subr.mxu0 0.0
        %512 = vmatpush1.msra.mxu0 0.0
        %513 = vmatprep.subr.mxu0 0.0
        %514 = vmatpush1.msra.mxu0 0.0
        %515 = vmatprep.subr.mxu0 0.0
        %516 = vmatpush1.msra.mxu0 0.0
        %517 = vmatprep.subr.mxu0 0.0
        %518 = vmatpush1.msra.mxu0 0.0
        %519 = vmatprep.subr.mxu0 0.0
        %520 = vmatpush1.msra.mxu0 0.0
        %521 = vmatprep.subr.mxu0 0.0
        %522 = vmatpush1.msra.mxu0 0.0
        %523 = vmatprep.subr.mxu0 0.0
        %524 = vmatpush1.msra.mxu0 0.0
        %525 = vmatprep.subr.mxu0 0.0
        %526 = vmatpush1.msra.mxu0 0.0
        %527 = vmatprep.subr.mxu0 0.0
        %528 = vmatpush1.msra.mxu0 0.0
        %529 = vmatprep.subr.mxu0 0.0
        %530 = vmatpush1.msra.mxu0 0.0
        %531 = vmatprep.subr.mxu0 0.0
        %532 = vmatpush1.msra.mxu0 0.0
        %533 = vmatprep.subr.mxu0 0.0
        %534 = vmatpush1.msra.mxu0 0.0
        %535 = vmatprep.subr.mxu0 0.0
        %536 = vmatpush1.msra.mxu0 0.0
        %537 = vmatprep.mubr.f32.mxu0 0.0
        %538 = vmatmul.mubr.f32.gmra.mrb[0].mxu0 %v471
        %v539 = vpop.f32.mrb[0].mxu0
        %v540 = vadd.f32 0.0, %v539
        %v541 = vpop.f32.mrb[0].mxu0
        %542 = vdwg.mxu0
        %v544 = vsel %vm469, %v464, 0
        %546 = vmatprep.subr.mxu0 0.0
        %547 = vmatpush1.msra.mxu0 %v467
        %548 = vmatprep.subr.mxu0 0.0
        %549 = vmatpush1.msra.mxu0 %v468
        %550 = vmatprep.subr.mxu0 0.0
        %551 = vmatpush1.msra.mxu0 0.0
        %552 = vmatprep.subr.mxu0 0.0
        %553 = vmatpush1.msra.mxu0 0.0
        %554 = vmatprep.subr.mxu0 0.0
        %555 = vmatpush1.msra.mxu0 0.0
        %556 = vmatprep.subr.mxu0 0.0
        %557 = vmatpush1.msra.mxu0 0.0
        %558 = vmatprep.subr.mxu0 0.0
        %559 = vmatpush1.msra.mxu0 0.0
        %560 = vmatprep.subr.mxu0 0.0
        %561 = vmatpush1.msra.mxu0 0.0
        %562 = vmatprep.subr.mxu0 0.0
        %563 = vmatpush1.msra.mxu0 0.0
        %564 = vmatprep.subr.mxu0 0.0
        %565 = vmatpush1.msra.mxu0 0.0
        %566 = vmatprep.subr.mxu0 0.0
        %567 = vmatpush1.msra.mxu0 0.0
        %568 = vmatprep.subr.mxu0 0.0
        %569 = vmatpush1.msra.mxu0 0.0
        %570 = vmatprep.subr.mxu0 0.0
        %571 = vmatpush1.msra.mxu0 0.0
        %572 = vmatprep.subr.mxu0 0.0
        %573 = vmatpush1.msra.mxu0 0.0
        %574 = vmatprep.subr.mxu0 0.0
        %575 = vmatpush1.msra.mxu0 0.0
        %576 = vmatprep.subr.mxu0 0.0
        %577 = vmatpush1.msra.mxu0 0.0
        %578 = vmatprep.subr.mxu0 0.0
        %579 = vmatpush1.msra.mxu0 0.0
        %580 = vmatprep.subr.mxu0 0.0
        %581 = vmatpush1.msra.mxu0 0.0
        %582 = vmatprep.subr.mxu0 0.0
        %583 = vmatpush1.msra.mxu0 0.0
        %584 = vmatprep.subr.mxu0 0.0
        %585 = vmatpush1.msra.mxu0 0.0
        %586 = vmatprep.subr.mxu0 0.0
        %587 = vmatpush1.msra.mxu0 0.0
        %588 = vmatprep.subr.mxu0 0.0
        %589 = vmatpush1.msra.mxu0 0.0
        %590 = vmatprep.subr.mxu0 0.0
        %591 = vmatpush1.msra.mxu0 0.0
        %592 = vmatprep.subr.mxu0 0.0
        %593 = vmatpush1.msra.mxu0 0.0
        %594 = vmatprep.subr.mxu0 0.0
        %595 = vmatpush1.msra.mxu0 0.0
        %596 = vmatprep.subr.mxu0 0.0
        %597 = vmatpush1.msra.mxu0 0.0
        %598 = vmatprep.subr.mxu0 0.0
        %599 = vmatpush1.msra.mxu0 0.0
        %600 = vmatprep.subr.mxu0 0.0
        %601 = vmatpush1.msra.mxu0 0.0
        %602 = vmatprep.subr.mxu0 0.0
        %603 = vmatpush1.msra.mxu0 0.0
        %604 = vmatprep.subr.mxu0 0.0
        %605 = vmatpush1.msra.mxu0 0.0
        %606 = vmatprep.subr.mxu0 0.0
        %607 = vmatpush1.msra.mxu0 0.0
        %608 = vmatprep.subr.mxu0 0.0
        %609 = vmatpush1.msra.mxu0 0.0
        %610 = vmatprep.mubr.f32.mxu0 0.0
        %611 = vmatmul.mubr.f32.gmra.mrb[0].mxu0 %v544
        %v612 = vpop.f32.mrb[0].mxu0
        %v613 = vadd.f32 0.0, %v612
        %v614 = vpop.f32.mrb[0].mxu0
        %615 = vdwg.mxu0
        %v616 = vmul.f32 %v540, 0.25
        %v617 = vmul.f32 %v613, 0.25
        %v618 = vld [vmem:[%s459] sm:$0xff]
        %v620 = vcombine.high %v618, %v618
        %v622 = vunpack.c.l.s4 1966171168
        %v623 = vunpack.c.0.s8 %v622
        %v624 = vlaneseq
        %v625 = vshrl.u32 %v624, 7
        %v626 = vsub.s32 %v623, %v625
        %v627 = vrot.slane %v618, %v626
        %v629 = vunpack.c.l.s4 1966171168
        %v630 = vunpack.c.0.s8 %v629
        %v631 = vlaneseq
        %v632 = vshrl.u32 %v631, 7
        %v633 = vsub.s32 %v630, %v632
        %v634 = vrot.slane %v620, %v633
        %v635 = vcombine.high %v627, %v627
        %v636 = vcombine.high %v634, %v634
        %v638 = vunpack.c.l.s4 1966171168
        %v639 = vunpack.c.0.s8 %v638
        %v640 = vlaneseq
        %v641 = vshrl.u32 %v640, 7
        %v642 = vsub.s32 %v639, %v641
        %v643 = vrot.slane %v627, %v642
        %v645 = vunpack.c.l.s4 1966171168
        %v646 = vunpack.c.0.s8 %v645
        %v647 = vlaneseq
        %v648 = vshrl.u32 %v647, 7
        %v649 = vsub.s32 %v646, %v648
        %v650 = vrot.slane %v634, %v649
        %v652 = vunpack.c.l.s4 1966171168
        %v653 = vunpack.c.0.s8 %v652
        %v654 = vlaneseq
        %v655 = vshrl.u32 %v654, 7
        %v656 = vsub.s32 %v653, %v655
        %v657 = vrot.slane %v635, %v656
        %v659 = vunpack.c.l.s4 1966171168
        %v660 = vunpack.c.0.s8 %v659
        %v661 = vlaneseq
        %v662 = vshrl.u32 %v661, 7
        %v663 = vsub.s32 %v660, %v662
        %v664 = vrot.slane %v636, %v663
        %v665 = vcombine.high %v643, %v643
        %v666 = vcombine.high %v650, %v650
        %v667 = vcombine.high %v657, %v657
        %v668 = vcombine.high %v664, %v664
        %v669 = vld [vmem:[%s6] sm:$0x1]
        %v670 = vlaneseq
        %v671 = vshrl.u32 %v670, 7
        %v672 = vsub.s32 0, %v671
        %v673 = vrot.slane %v669, %v672
        %675 = vbcast.lane.b32.xlu0 %v673, 256
        %v676 = vpop.permute.xlu0 %675
        %v677 = vlaneseq
        %v678 = vshrl.u32 %v677, 7
        %v679 = vsub.s32 0, %v678
        %v680 = vrot.slane %v643, %v679
        %v681 = vlaneseq
        %v682 = vshrl.u32 %v681, 7
        %v683 = vsub.s32 0, %v682
        %v684 = vrot.slane %v657, %v683
        %v685 = vlaneseq
        %v686 = vshrl.u32 %v685, 7
        %v687 = vsub.s32 0, %v686
        %v688 = vrot.slane %v665, %v687
        %v689 = vlaneseq
        %v690 = vshrl.u32 %v689, 7
        %v691 = vsub.s32 0, %v690
        %v692 = vrot.slane %v667, %v691
        %v693 = vlaneseq
        %v694 = vshrl.u32 %v693, 7
        %v695 = vsub.s32 0, %v694
        %v696 = vrot.slane %v650, %v695
        %v697 = vlaneseq
        %v698 = vshrl.u32 %v697, 7
        %v699 = vsub.s32 0, %v698
        %v700 = vrot.slane %v664, %v699
        %v701 = vlaneseq
        %v702 = vshrl.u32 %v701, 7
        %v703 = vsub.s32 0, %v702
        %v704 = vrot.slane %v666, %v703
        %v705 = vlaneseq
        %v706 = vshrl.u32 %v705, 7
        %v707 = vsub.s32 0, %v706
        %v708 = vrot.slane %v668, %v707
        %v717 = vadd.f32 %v680, %v676
        %v718 = vadd.f32 %v684, %v676
        %v719 = vadd.f32 %v688, %v676
        %v720 = vadd.f32 %v692, %v676
        %v721 = vadd.f32 %v696, %v676
        %v722 = vadd.f32 %v700, %v676
        %v723 = vadd.f32 %v704, %v676
        %v724 = vadd.f32 %v708, %v676
        %v725 = vsub.f32 %v680, %v676
        %v726 = vsub.f32 %v684, %v676
        %v727 = vsub.f32 %v688, %v676
        %v728 = vsub.f32 %v692, %v676
        %v729 = vsub.f32 %v696, %v676
        %v730 = vsub.f32 %v700, %v676
        %v731 = vsub.f32 %v704, %v676
        %v732 = vsub.f32 %v708, %v676
        %v733 = vld [vmem:[%s449] sm:$0x1]
        %v734 = vld [vmem:[%s449 + $0x1] sm:$0x1]
        %v735 = vld [vmem:[%s454] sm:$0x1]
        %v736 = vld [vmem:[%s454 + $0x1] sm:$0x1]
        %vm737 = vnez %v735
        %vm738 = vnez %v736
        %v741 = vlaneseq
        %v742 = vshrl.u32 %v741, 7
        %v743 = vsub.s32 0, %v742
        %v744 = vrot.slane %v733, %v743
        %v745 = vlaneseq
        %v746 = vshrl.u32 %v745, 7
        %v747 = vsub.s32 0, %v746
        %v748 = vrot.slane %v734, %v747
        %752 = vset.pattern.permute.xlu0 0
        %753 = vperm.xlu0 %752, %v717
        %v754 = vpop.permute.xlu0 %753
        %757 = vset.pattern.permute.xlu0 0
        %758 = vperm.xlu0 %757, %v718
        %v759 = vpop.permute.xlu0 %758
        %762 = vset.pattern.permute.xlu0 0
        %763 = vperm.xlu0 %762, %v719
        %v764 = vpop.permute.xlu0 %763
        %767 = vset.pattern.permute.xlu0 0
        %768 = vperm.xlu0 %767, %v720
        %v769 = vpop.permute.xlu0 %768
        %772 = vset.pattern.permute.xlu0 0
        %773 = vperm.xlu0 %772, %v721
        %v774 = vpop.permute.xlu0 %773
        %777 = vset.pattern.permute.xlu0 0
        %778 = vperm.xlu0 %777, %v722
        %v779 = vpop.permute.xlu0 %778
        %782 = vset.pattern.permute.xlu0 0
        %783 = vperm.xlu0 %782, %v723
        %v784 = vpop.permute.xlu0 %783
        %787 = vset.pattern.permute.xlu0 0
        %788 = vperm.xlu0 %787, %v724
        %v789 = vpop.permute.xlu0 %788
        %vm791 = vcmp.le.f32.partialorder %v744, %v754
        %vm792 = vcmp.le.f32.partialorder %v744, %v759
        %vm793 = vcmp.le.f32.partialorder %v744, %v764
        %vm794 = vcmp.le.f32.partialorder %v744, %v769
        %vm795 = vcmp.le.f32.partialorder %v744, %v774
        %vm796 = vcmp.le.f32.partialorder %v744, %v779
        %vm797 = vcmp.le.f32.partialorder %v744, %v784
        %vm798 = vcmp.le.f32.partialorder %v744, %v789
        %vm799 = vcmp.le.f32.partialorder %v748, %v754
        %vm800 = vcmp.le.f32.partialorder %v748, %v759
        %vm801 = vcmp.le.f32.partialorder %v748, %v764
        %vm802 = vcmp.le.f32.partialorder %v748, %v769
        %vm803 = vcmp.le.f32.partialorder %v748, %v774
        %vm804 = vcmp.le.f32.partialorder %v748, %v779
        %vm805 = vcmp.le.f32.partialorder %v748, %v784
        %vm806 = vcmp.le.f32.partialorder %v748, %v789
        %808 = vset.pattern.permute.xlu0 0
        %809 = vperm.xlu0 %808, %v725
        %v810 = vpop.permute.xlu0 %809
        %813 = vset.pattern.permute.xlu0 0
        %814 = vperm.xlu0 %813, %v726
        %v815 = vpop.permute.xlu0 %814
        %818 = vset.pattern.permute.xlu0 0
        %819 = vperm.xlu0 %818, %v727
        %v820 = vpop.permute.xlu0 %819
        %823 = vset.pattern.permute.xlu0 0
        %824 = vperm.xlu0 %823, %v728
        %v825 = vpop.permute.xlu0 %824
        %828 = vset.pattern.permute.xlu0 0
        %829 = vperm.xlu0 %828, %v729
        %v830 = vpop.permute.xlu0 %829
        %833 = vset.pattern.permute.xlu0 0
        %834 = vperm.xlu0 %833, %v730
        %v835 = vpop.permute.xlu0 %834
        %838 = vset.pattern.permute.xlu0 0
        %839 = vperm.xlu0 %838, %v731
        %v840 = vpop.permute.xlu0 %839
        %843 = vset.pattern.permute.xlu0 0
        %844 = vperm.xlu0 %843, %v732
        %v845 = vpop.permute.xlu0 %844
        %vm847 = vcmp.ge.f32.partialorder %v744, %v810
        %vm848 = vcmp.ge.f32.partialorder %v744, %v815
        %vm849 = vcmp.ge.f32.partialorder %v744, %v820
        %vm850 = vcmp.ge.f32.partialorder %v744, %v825
        %vm851 = vcmp.ge.f32.partialorder %v744, %v830
        %vm852 = vcmp.ge.f32.partialorder %v744, %v835
        %vm853 = vcmp.ge.f32.partialorder %v744, %v840
        %vm854 = vcmp.ge.f32.partialorder %v744, %v845
        %vm855 = vcmp.ge.f32.partialorder %v748, %v810
        %vm856 = vcmp.ge.f32.partialorder %v748, %v815
        %vm857 = vcmp.ge.f32.partialorder %v748, %v820
        %vm858 = vcmp.ge.f32.partialorder %v748, %v825
        %vm859 = vcmp.ge.f32.partialorder %v748, %v830
        %vm860 = vcmp.ge.f32.partialorder %v748, %v835
        %vm861 = vcmp.ge.f32.partialorder %v748, %v840
        %vm862 = vcmp.ge.f32.partialorder %v748, %v845
        %vm863 = vmand %vm791, %vm847
        %vm864 = vmand %vm792, %vm848
        %vm865 = vmand %vm793, %vm849
        %vm866 = vmand %vm794, %vm850
        %vm867 = vmand %vm795, %vm851
        %vm868 = vmand %vm796, %vm852
        %vm869 = vmand %vm797, %vm853
        %vm870 = vmand %vm798, %vm854
        %vm871 = vmand %vm799, %vm855
        %vm872 = vmand %vm800, %vm856
        %vm873 = vmand %vm801, %vm857
        %vm874 = vmand %vm802, %vm858
        %vm875 = vmand %vm803, %vm859
        %vm876 = vmand %vm804, %vm860
        %vm877 = vmand %vm805, %vm861
        %vm878 = vmand %vm806, %vm862
        %v879 = vsel %vm737, 16843009, 0
        %v880 = vsel %vm738, 16843009, 0
        %v881 = vunpack.c.0.s8 %v879
        %v882 = vunpack.c.0.s8 %v880
        %vm883 = vcmp.ne.s32.totalorder %v881, 0
        %vm884 = vcmp.ne.s32.totalorder %v882, 0
        %v885 = vsel %vm883, 1, 0
        %v886 = vsel %vm884, 1, 0
        %vm887 = vcmp.eq.s32.totalorder %v885, 1
        %vm888 = vcmp.eq.s32.totalorder %v886, 1
        %vm889 = vmand %vm863, %vm887
        %vm890 = vmand %vm864, %vm887
        %vm891 = vmand %vm865, %vm887
        %vm892 = vmand %vm866, %vm887
        %vm893 = vmand %vm867, %vm887
        %vm894 = vmand %vm868, %vm887
        %vm895 = vmand %vm869, %vm887
        %vm896 = vmand %vm870, %vm887
        %vm897 = vmand %vm871, %vm888
        %vm898 = vmand %vm872, %vm888
        %vm899 = vmand %vm873, %vm888
        %vm900 = vmand %vm874, %vm888
        %vm901 = vmand %vm875, %vm888
        %vm902 = vmand %vm876, %vm888
        %vm903 = vmand %vm877, %vm888
        %vm904 = vmand %vm878, %vm888
        %v907 = vcombine.high %v616, %v616
        %v909 = vunpack.c.l.s4 1966171168
        %v910 = vunpack.c.0.s8 %v909
        %v911 = vlaneseq
        %v912 = vshrl.u32 %v911, 7
        %v913 = vsub.s32 %v910, %v912
        %v914 = vrot.slane %v616, %v913
        %v916 = vunpack.c.l.s4 1966171168
        %v917 = vunpack.c.0.s8 %v916
        %v918 = vlaneseq
        %v919 = vshrl.u32 %v918, 7
        %v920 = vsub.s32 %v917, %v919
        %v921 = vrot.slane %v907, %v920
        %v922 = vcombine.high %v914, %v914
        %v923 = vcombine.high %v921, %v921
        %v925 = vunpack.c.l.s4 1966171168
        %v926 = vunpack.c.0.s8 %v925
        %v927 = vlaneseq
        %v928 = vshrl.u32 %v927, 7
        %v929 = vsub.s32 %v926, %v928
        %v930 = vrot.slane %v914, %v929
        %v932 = vunpack.c.l.s4 1966171168
        %v933 = vunpack.c.0.s8 %v932
        %v934 = vlaneseq
        %v935 = vshrl.u32 %v934, 7
        %v936 = vsub.s32 %v933, %v935
        %v937 = vrot.slane %v921, %v936
        %v939 = vunpack.c.l.s4 1966171168
        %v940 = vunpack.c.0.s8 %v939
        %v941 = vlaneseq
        %v942 = vshrl.u32 %v941, 7
        %v943 = vsub.s32 %v940, %v942
        %v944 = vrot.slane %v922, %v943
        %v946 = vunpack.c.l.s4 1966171168
        %v947 = vunpack.c.0.s8 %v946
        %v948 = vlaneseq
        %v949 = vshrl.u32 %v948, 7
        %v950 = vsub.s32 %v947, %v949
        %v951 = vrot.slane %v923, %v950
        %v952 = vcombine.high %v930, %v930
        %v953 = vcombine.high %v937, %v937
        %v954 = vcombine.high %v944, %v944
        %v955 = vcombine.high %v951, %v951
        %v956 = vcombine.high %v617, %v617
        %v958 = vunpack.c.l.s4 1966171168
        %v959 = vunpack.c.0.s8 %v958
        %v960 = vlaneseq
        %v961 = vshrl.u32 %v960, 7
        %v962 = vsub.s32 %v959, %v961
        %v963 = vrot.slane %v617, %v962
        %v965 = vunpack.c.l.s4 1966171168
        %v966 = vunpack.c.0.s8 %v965
        %v967 = vlaneseq
        %v968 = vshrl.u32 %v967, 7
        %v969 = vsub.s32 %v966, %v968
        %v970 = vrot.slane %v956, %v969
        %v971 = vcombine.high %v963, %v963
        %v972 = vcombine.high %v970, %v970
        %v974 = vunpack.c.l.s4 1966171168
        %v975 = vunpack.c.0.s8 %v974
        %v976 = vlaneseq
        %v977 = vshrl.u32 %v976, 7
        %v978 = vsub.s32 %v975, %v977
        %v979 = vrot.slane %v963, %v978
        %v981 = vunpack.c.l.s4 1966171168
        %v982 = vunpack.c.0.s8 %v981
        %v983 = vlaneseq
        %v984 = vshrl.u32 %v983, 7
        %v985 = vsub.s32 %v982, %v984
        %v986 = vrot.slane %v970, %v985
        %v988 = vunpack.c.l.s4 1966171168
        %v989 = vunpack.c.0.s8 %v988
        %v990 = vlaneseq
        %v991 = vshrl.u32 %v990, 7
        %v992 = vsub.s32 %v989, %v991
        %v993 = vrot.slane %v971, %v992
        %v995 = vunpack.c.l.s4 1966171168
        %v996 = vunpack.c.0.s8 %v995
        %v997 = vlaneseq
        %v998 = vshrl.u32 %v997, 7
        %v999 = vsub.s32 %v996, %v998
        %v1000 = vrot.slane %v972, %v999
        %v1001 = vcombine.high %v979, %v979
        %v1002 = vcombine.high %v986, %v986
        %v1003 = vcombine.high %v993, %v993
        %v1004 = vcombine.high %v1000, %v1000
        %v1005 = vlaneseq
        %v1006 = vshrl.u32 %v1005, 7
        %v1007 = vsub.s32 0, %v1006
        %v1008 = vrot.slane %v930, %v1007
        %v1009 = vlaneseq
        %v1010 = vshrl.u32 %v1009, 7
        %v1011 = vsub.s32 0, %v1010
        %v1012 = vrot.slane %v944, %v1011
        %v1013 = vlaneseq
        %v1014 = vshrl.u32 %v1013, 7
        %v1015 = vsub.s32 0, %v1014
        %v1016 = vrot.slane %v952, %v1015
        %v1017 = vlaneseq
        %v1018 = vshrl.u32 %v1017, 7
        %v1019 = vsub.s32 0, %v1018
        %v1020 = vrot.slane %v954, %v1019
        %v1021 = vlaneseq
        %v1022 = vshrl.u32 %v1021, 7
        %v1023 = vsub.s32 0, %v1022
        %v1024 = vrot.slane %v937, %v1023
        %v1025 = vlaneseq
        %v1026 = vshrl.u32 %v1025, 7
        %v1027 = vsub.s32 0, %v1026
        %v1028 = vrot.slane %v951, %v1027
        %v1029 = vlaneseq
        %v1030 = vshrl.u32 %v1029, 7
        %v1031 = vsub.s32 0, %v1030
        %v1032 = vrot.slane %v953, %v1031
        %v1033 = vlaneseq
        %v1034 = vshrl.u32 %v1033, 7
        %v1035 = vsub.s32 0, %v1034
        %v1036 = vrot.slane %v955, %v1035
        %v1037 = vlaneseq
        %v1038 = vshrl.u32 %v1037, 7
        %v1039 = vsub.s32 0, %v1038
        %v1040 = vrot.slane %v979, %v1039
        %v1041 = vlaneseq
        %v1042 = vshrl.u32 %v1041, 7
        %v1043 = vsub.s32 0, %v1042
        %v1044 = vrot.slane %v993, %v1043
        %v1045 = vlaneseq
        %v1046 = vshrl.u32 %v1045, 7
        %v1047 = vsub.s32 0, %v1046
        %v1048 = vrot.slane %v1001, %v1047
        %v1049 = vlaneseq
        %v1050 = vshrl.u32 %v1049, 7
        %v1051 = vsub.s32 0, %v1050
        %v1052 = vrot.slane %v1003, %v1051
        %v1053 = vlaneseq
        %v1054 = vshrl.u32 %v1053, 7
        %v1055 = vsub.s32 0, %v1054
        %v1056 = vrot.slane %v986, %v1055
        %v1057 = vlaneseq
        %v1058 = vshrl.u32 %v1057, 7
        %v1059 = vsub.s32 0, %v1058
        %v1060 = vrot.slane %v1000, %v1059
        %v1061 = vlaneseq
        %v1062 = vshrl.u32 %v1061, 7
        %v1063 = vsub.s32 0, %v1062
        %v1064 = vrot.slane %v1002, %v1063
        %v1065 = vlaneseq
        %v1066 = vshrl.u32 %v1065, 7
        %v1067 = vsub.s32 0, %v1066
        %v1068 = vrot.slane %v1004, %v1067
        %v1085 = vsel %vm889, %v1008, -1e+09
        %v1086 = vsel %vm890, %v1012, -1e+09
        %v1087 = vsel %vm891, %v1016, -1e+09
        %v1088 = vsel %vm892, %v1020, -1e+09
        %v1089 = vsel %vm893, %v1024, -1e+09
        %v1090 = vsel %vm894, %v1028, -1e+09
        %v1091 = vsel %vm895, %v1032, -1e+09
        %v1092 = vsel %vm896, %v1036, -1e+09
        %v1093 = vsel %vm897, %v1040, -1e+09
        %v1094 = vsel %vm898, %v1044, -1e+09
        %v1095 = vsel %vm899, %v1048, -1e+09
        %v1096 = vsel %vm900, %v1052, -1e+09
        %v1097 = vsel %vm901, %v1056, -1e+09
        %v1098 = vsel %vm902, %v1060, -1e+09
        %v1099 = vsel %vm903, %v1064, -1e+09
        %v1100 = vsel %vm904, %v1068, -1e+09
        %vm1101 = vcmask 60416
        %v1102 = vsel %vm1101, %v1085, -inf
        %1103 = vmax.xlane.f32.xlu0 %v1102
        %v1104 = vpop.xlane.xlu0 %1103
        %v1105 = vsel %vm1101, %v1086, -inf
        %1106 = vmax.xlane.f32.xlu0 %v1105
        %v1107 = vpop.xlane.xlu0 %1106
        %v1108 = vsel %vm1101, %v1087, -inf
        %1109 = vmax.xlane.f32.xlu0 %v1108
        %v1110 = vpop.xlane.xlu0 %1109
        %v1111 = vsel %vm1101, %v1088, -inf
        %1112 = vmax.xlane.f32.xlu0 %v1111
        %v1113 = vpop.xlane.xlu0 %1112
        %v1114 = vsel %vm1101, %v1089, -inf
        %1115 = vmax.xlane.f32.xlu0 %v1114
        %v1116 = vpop.xlane.xlu0 %1115
        %v1117 = vsel %vm1101, %v1090, -inf
        %1118 = vmax.xlane.f32.xlu0 %v1117
        %v1119 = vpop.xlane.xlu0 %1118
        %v1120 = vsel %vm1101, %v1091, -inf
        %1121 = vmax.xlane.f32.xlu0 %v1120
        %v1122 = vpop.xlane.xlu0 %1121
        %v1123 = vsel %vm1101, %v1092, -inf
        %1124 = vmax.xlane.f32.xlu0 %v1123
        %v1125 = vpop.xlane.xlu0 %1124
        %v1126 = vsel %vm1101, %v1093, -inf
        %1127 = vmax.xlane.f32.xlu0 %v1126
        %v1128 = vpop.xlane.xlu0 %1127
        %v1129 = vsel %vm1101, %v1094, -inf
        %1130 = vmax.xlane.f32.xlu0 %v1129
        %v1131 = vpop.xlane.xlu0 %1130
        %v1132 = vsel %vm1101, %v1095, -inf
        %1133 = vmax.xlane.f32.xlu0 %v1132
        %v1134 = vpop.xlane.xlu0 %1133
        %v1135 = vsel %vm1101, %v1096, -inf
        %1136 = vmax.xlane.f32.xlu0 %v1135
        %v1137 = vpop.xlane.xlu0 %1136
        %v1138 = vsel %vm1101, %v1097, -inf
        %1139 = vmax.xlane.f32.xlu0 %v1138
        %v1140 = vpop.xlane.xlu0 %1139
        %v1141 = vsel %vm1101, %v1098, -inf
        %1142 = vmax.xlane.f32.xlu0 %v1141
        %v1143 = vpop.xlane.xlu0 %1142
        %v1144 = vsel %vm1101, %v1099, -inf
        %1145 = vmax.xlane.f32.xlu0 %v1144
        %v1146 = vpop.xlane.xlu0 %1145
        %v1147 = vsel %vm1101, %v1100, -inf
        %1148 = vmax.xlane.f32.xlu0 %v1147
        %v1149 = vpop.xlane.xlu0 %1148
        %v1150 = vsub.f32 %v1085, %v1104
        %v1151 = vsub.f32 %v1086, %v1107
        %v1152 = vsub.f32 %v1087, %v1110
        %v1153 = vsub.f32 %v1088, %v1113
        %v1154 = vsub.f32 %v1089, %v1116
        %v1155 = vsub.f32 %v1090, %v1119
        %v1156 = vsub.f32 %v1091, %v1122
        %v1157 = vsub.f32 %v1092, %v1125
        %v1158 = vsub.f32 %v1093, %v1128
        %v1159 = vsub.f32 %v1094, %v1131
        %v1160 = vsub.f32 %v1095, %v1134
        %v1161 = vsub.f32 %v1096, %v1137
        %v1162 = vsub.f32 %v1097, %v1140
        %v1163 = vsub.f32 %v1098, %v1143
        %v1164 = vsub.f32 %v1099, %v1146
        %v1165 = vsub.f32 %v1100, %v1149
        %v1166 = vmul.f32 %v1150, 1.442695
        %v1167 = vpow.pop %v1166
        %v1168 = vmul.f32 %v1151, 1.442695
        %v1169 = vpow.pop %v1168
        %v1170 = vmul.f32 %v1152, 1.442695
        %v1171 = vpow.pop %v1170
        %v1172 = vmul.f32 %v1153, 1.442695
        %v1173 = vpow.pop %v1172
        %v1174 = vmul.f32 %v1154, 1.442695
        %v1175 = vpow.pop %v1174
        %v1176 = vmul.f32 %v1155, 1.442695
        %v1177 = vpow.pop %v1176
        %v1178 = vmul.f32 %v1156, 1.442695
        %v1179 = vpow.pop %v1178
        %v1180 = vmul.f32 %v1157, 1.442695
        %v1181 = vpow.pop %v1180
        %v1182 = vmul.f32 %v1158, 1.442695
        %v1183 = vpow.pop %v1182
        %v1184 = vmul.f32 %v1159, 1.442695
        %v1185 = vpow.pop %v1184
        %v1186 = vmul.f32 %v1160, 1.442695
        %v1187 = vpow.pop %v1186
        %v1188 = vmul.f32 %v1161, 1.442695
        %v1189 = vpow.pop %v1188
        %v1190 = vmul.f32 %v1162, 1.442695
        %v1191 = vpow.pop %v1190
        %v1192 = vmul.f32 %v1163, 1.442695
        %v1193 = vpow.pop %v1192
        %v1194 = vmul.f32 %v1164, 1.442695
        %v1195 = vpow.pop %v1194
        %v1196 = vmul.f32 %v1165, 1.442695
        %v1197 = vpow.pop %v1196
        %v1198 = vsel %vm1101, %v1167, 0.0
        %1199 = vadd.xlane.f32.xlu0 %v1198
        %v1200 = vpop.xlane.xlu0 %1199
        %v1201 = vsel %vm1101, %v1169, 0.0
        %1202 = vadd.xlane.f32.xlu0 %v1201
        %v1203 = vpop.xlane.xlu0 %1202
        %v1204 = vsel %vm1101, %v1171, 0.0
        %1205 = vadd.xlane.f32.xlu0 %v1204
        %v1206 = vpop.xlane.xlu0 %1205
        %v1207 = vsel %vm1101, %v1173, 0.0
        %1208 = vadd.xlane.f32.xlu0 %v1207
        %v1209 = vpop.xlane.xlu0 %1208
        %v1210 = vsel %vm1101, %v1175, 0.0
        %1211 = vadd.xlane.f32.xlu0 %v1210
        %v1212 = vpop.xlane.xlu0 %1211
        %v1213 = vsel %vm1101, %v1177, 0.0
        %1214 = vadd.xlane.f32.xlu0 %v1213
        %v1215 = vpop.xlane.xlu0 %1214
        %v1216 = vsel %vm1101, %v1179, 0.0
        %1217 = vadd.xlane.f32.xlu0 %v1216
        %v1218 = vpop.xlane.xlu0 %1217
        %v1219 = vsel %vm1101, %v1181, 0.0
        %1220 = vadd.xlane.f32.xlu0 %v1219
        %v1221 = vpop.xlane.xlu0 %1220
        %v1222 = vsel %vm1101, %v1183, 0.0
        %1223 = vadd.xlane.f32.xlu0 %v1222
        %v1224 = vpop.xlane.xlu0 %1223
        %v1225 = vsel %vm1101, %v1185, 0.0
        %1226 = vadd.xlane.f32.xlu0 %v1225
        %v1227 = vpop.xlane.xlu0 %1226
        %v1228 = vsel %vm1101, %v1187, 0.0
        %1229 = vadd.xlane.f32.xlu0 %v1228
        %v1230 = vpop.xlane.xlu0 %1229
        %v1231 = vsel %vm1101, %v1189, 0.0
        %1232 = vadd.xlane.f32.xlu0 %v1231
        %v1233 = vpop.xlane.xlu0 %1232
        %v1234 = vsel %vm1101, %v1191, 0.0
        %1235 = vadd.xlane.f32.xlu0 %v1234
        %v1236 = vpop.xlane.xlu0 %1235
        %v1237 = vsel %vm1101, %v1193, 0.0
        %1238 = vadd.xlane.f32.xlu0 %v1237
        %v1239 = vpop.xlane.xlu0 %1238
        %v1240 = vsel %vm1101, %v1195, 0.0
        %1241 = vadd.xlane.f32.xlu0 %v1240
        %v1242 = vpop.xlane.xlu0 %1241
        %v1243 = vsel %vm1101, %v1197, 0.0
        %1244 = vadd.xlane.f32.xlu0 %v1243
        %v1245 = vpop.xlane.xlu0 %1244
        %v1246 = vld [vmem:[%s444] sm:$0xf]
        %v1247 = vld [vmem:[%s444 + $0x4] sm:$0xf]
        %v1248 = vmul.f32 %v1167, %v1246
        %v1249 = vmul.f32 %v1169, %v1246
        %v1250 = vmul.f32 %v1171, %v1246
        %v1251 = vmul.f32 %v1173, %v1246
        %v1252 = vmul.f32 %v1175, %v1246
        %v1253 = vmul.f32 %v1177, %v1246
        %v1254 = vmul.f32 %v1179, %v1246
        %v1255 = vmul.f32 %v1181, %v1246
        %v1256 = vmul.f32 %v1183, %v1247
        %v1257 = vmul.f32 %v1185, %v1247
        %v1258 = vmul.f32 %v1187, %v1247
        %v1259 = vmul.f32 %v1189, %v1247
        %v1260 = vmul.f32 %v1191, %v1247
        %v1261 = vmul.f32 %v1193, %v1247
        %v1262 = vmul.f32 %v1195, %v1247
        %v1263 = vmul.f32 %v1197, %v1247
        %v1264 = vsel %vm1101, %v1248, 0.0
        %1265 = vadd.xlane.f32.xlu0 %v1264
        %v1266 = vpop.xlane.xlu0 %1265
        %v1267 = vsel %vm1101, %v1249, 0.0
        %1268 = vadd.xlane.f32.xlu0 %v1267
        %v1269 = vpop.xlane.xlu0 %1268
        %v1270 = vsel %vm1101, %v1250, 0.0
        %1271 = vadd.xlane.f32.xlu0 %v1270
        %v1272 = vpop.xlane.xlu0 %1271
        %v1273 = vsel %vm1101, %v1251, 0.0
        %1274 = vadd.xlane.f32.xlu0 %v1273
        %v1275 = vpop.xlane.xlu0 %1274
        %v1276 = vsel %vm1101, %v1252, 0.0
        %1277 = vadd.xlane.f32.xlu0 %v1276
        %v1278 = vpop.xlane.xlu0 %1277
        %v1279 = vsel %vm1101, %v1253, 0.0
        %1280 = vadd.xlane.f32.xlu0 %v1279
        %v1281 = vpop.xlane.xlu0 %1280
        %v1282 = vsel %vm1101, %v1254, 0.0
        %1283 = vadd.xlane.f32.xlu0 %v1282
        %v1284 = vpop.xlane.xlu0 %1283
        %v1285 = vsel %vm1101, %v1255, 0.0
        %1286 = vadd.xlane.f32.xlu0 %v1285
        %v1287 = vpop.xlane.xlu0 %1286
        %v1288 = vsel %vm1101, %v1256, 0.0
        %1289 = vadd.xlane.f32.xlu0 %v1288
        %v1290 = vpop.xlane.xlu0 %1289
        %v1291 = vsel %vm1101, %v1257, 0.0
        %1292 = vadd.xlane.f32.xlu0 %v1291
        %v1293 = vpop.xlane.xlu0 %1292
        %v1294 = vsel %vm1101, %v1258, 0.0
        %1295 = vadd.xlane.f32.xlu0 %v1294
        %v1296 = vpop.xlane.xlu0 %1295
        %v1297 = vsel %vm1101, %v1259, 0.0
        %1298 = vadd.xlane.f32.xlu0 %v1297
        %v1299 = vpop.xlane.xlu0 %1298
        %v1300 = vsel %vm1101, %v1260, 0.0
        %1301 = vadd.xlane.f32.xlu0 %v1300
        %v1302 = vpop.xlane.xlu0 %1301
        %v1303 = vsel %vm1101, %v1261, 0.0
        %1304 = vadd.xlane.f32.xlu0 %v1303
        %v1305 = vpop.xlane.xlu0 %1304
        %v1306 = vsel %vm1101, %v1262, 0.0
        %1307 = vadd.xlane.f32.xlu0 %v1306
        %v1308 = vpop.xlane.xlu0 %1307
        %v1309 = vsel %vm1101, %v1263, 0.0
        %1310 = vadd.xlane.f32.xlu0 %v1309
        %v1311 = vpop.xlane.xlu0 %1310
        %v1312 = vrcp.pop %v1200
        %v1313 = vmul.f32 %v1266, %v1312
        %v1314 = vrcp.pop %v1203
        %v1315 = vmul.f32 %v1269, %v1314
        %v1316 = vrcp.pop %v1206
        %v1317 = vmul.f32 %v1272, %v1316
        %v1318 = vrcp.pop %v1209
        %v1319 = vmul.f32 %v1275, %v1318
        %v1320 = vrcp.pop %v1212
        %v1321 = vmul.f32 %v1278, %v1320
        %v1322 = vrcp.pop %v1215
        %v1323 = vmul.f32 %v1281, %v1322
        %v1324 = vrcp.pop %v1218
        %v1325 = vmul.f32 %v1284, %v1324
        %v1326 = vrcp.pop %v1221
        %v1327 = vmul.f32 %v1287, %v1326
        %v1328 = vrcp.pop %v1224
        %v1329 = vmul.f32 %v1290, %v1328
        %v1330 = vrcp.pop %v1227
        %v1331 = vmul.f32 %v1293, %v1330
        %v1332 = vrcp.pop %v1230
        %v1333 = vmul.f32 %v1296, %v1332
        %v1334 = vrcp.pop %v1233
        %v1335 = vmul.f32 %v1299, %v1334
        %v1336 = vrcp.pop %v1236
        %v1337 = vmul.f32 %v1302, %v1336
        %v1338 = vrcp.pop %v1239
        %v1339 = vmul.f32 %v1305, %v1338
        %v1340 = vrcp.pop %v1242
        %v1341 = vmul.f32 %v1308, %v1340
        %v1342 = vrcp.pop %v1245
        %v1343 = vmul.f32 %v1311, %v1342
        %v1344 = vld [vmem:[%s7] sm:$0xf]
        %v1345 = vld [vmem:[%s8] sm:$0x1]
        %v1347 = vlaneseq
        %v1348 = vshrl.u32 %v1347, 7
        %v1349 = vsub.s32 0, %v1348
        %v1350 = vrot.slane %v1345, %v1349
        %v1368 = vlaneseq
        %v1369 = vand.u32 %v1368, 127
        %v1370 = vlaneseq
        %v1371 = vshrl.u32 %v1370, 7
        %v1372 = vsub.s32 %v1369, %v1371
        %v1373 = vrot.slane %v1313, %v1372
        %v1374 = vlaneseq
        %v1375 = vshrl.u32 %v1374, 7
        %v1376 = vsub.s32 %v1369, %v1375
        %v1377 = vrot.slane %v1315, %v1376
        %v1378 = vlaneseq
        %v1379 = vshrl.u32 %v1378, 7
        %v1380 = vsub.s32 %v1369, %v1379
        %v1381 = vrot.slane %v1317, %v1380
        %v1382 = vlaneseq
        %v1383 = vshrl.u32 %v1382, 7
        %v1384 = vsub.s32 %v1369, %v1383
        %v1385 = vrot.slane %v1319, %v1384
        %v1386 = vlaneseq
        %v1387 = vshrl.u32 %v1386, 7
        %v1388 = vsub.s32 %v1369, %v1387
        %v1389 = vrot.slane %v1321, %v1388
        %v1390 = vlaneseq
        %v1391 = vshrl.u32 %v1390, 7
        %v1392 = vsub.s32 %v1369, %v1391
        %v1393 = vrot.slane %v1323, %v1392
        %v1394 = vlaneseq
        %v1395 = vshrl.u32 %v1394, 7
        %v1396 = vsub.s32 %v1369, %v1395
        %v1397 = vrot.slane %v1325, %v1396
        %v1398 = vlaneseq
        %v1399 = vshrl.u32 %v1398, 7
        %v1400 = vsub.s32 %v1369, %v1399
        %v1401 = vrot.slane %v1327, %v1400
        %v1402 = vlaneseq
        %v1403 = vshrl.u32 %v1402, 7
        %v1404 = vsub.s32 %v1369, %v1403
        %v1405 = vrot.slane %v1329, %v1404
        %v1406 = vlaneseq
        %v1407 = vshrl.u32 %v1406, 7
        %v1408 = vsub.s32 %v1369, %v1407
        %v1409 = vrot.slane %v1331, %v1408
        %v1410 = vlaneseq
        %v1411 = vshrl.u32 %v1410, 7
        %v1412 = vsub.s32 %v1369, %v1411
        %v1413 = vrot.slane %v1333, %v1412
        %v1414 = vlaneseq
        %v1415 = vshrl.u32 %v1414, 7
        %v1416 = vsub.s32 %v1369, %v1415
        %v1417 = vrot.slane %v1335, %v1416
        %v1418 = vlaneseq
        %v1419 = vshrl.u32 %v1418, 7
        %v1420 = vsub.s32 %v1369, %v1419
        %v1421 = vrot.slane %v1337, %v1420
        %v1422 = vlaneseq
        %v1423 = vshrl.u32 %v1422, 7
        %v1424 = vsub.s32 %v1369, %v1423
        %v1425 = vrot.slane %v1339, %v1424
        %v1426 = vlaneseq
        %v1427 = vshrl.u32 %v1426, 7
        %v1428 = vsub.s32 %v1369, %v1427
        %v1429 = vrot.slane %v1341, %v1428
        %v1430 = vlaneseq
        %v1431 = vshrl.u32 %v1430, 7
        %v1432 = vsub.s32 %v1369, %v1431
        %v1433 = vrot.slane %v1343, %v1432
        %vm1434 = vcmask 1041409
        %v1435 = vsel %vm1434, %v1377, %v1373
        %vm1436 = vcmask 1042434
        %v1437 = vsel %vm1436, %v1381, %v1435
        %vm1438 = vcmask 1043459
        %v1439 = vsel %vm1438, %v1385, %v1437
        %vm1440 = vcmask 1044484
        %v1441 = vsel %vm1440, %v1389, %v1439
        %vm1442 = vcmask 1045509
        %v1443 = vsel %vm1442, %v1393, %v1441
        %vm1444 = vcmask 1046534
        %v1445 = vsel %vm1444, %v1397, %v1443
        %vm1446 = vcmask 1047559
        %v1447 = vsel %vm1446, %v1401, %v1445
        %v1448 = vsel %vm1434, %v1409, %v1405
        %v1449 = vsel %vm1436, %v1413, %v1448
        %v1450 = vsel %vm1438, %v1417, %v1449
        %v1451 = vsel %vm1440, %v1421, %v1450
        %v1452 = vsel %vm1442, %v1425, %v1451
        %v1453 = vsel %vm1444, %v1429, %v1452
        %v1454 = vsel %vm1446, %v1433, %v1453
        %vm1455 = vcmask 31744
        %v1456 = vsel %vm1455, %v1447, 0
        %v1458 = vsel %vm1455, %v1454, 0
        %vm1460 = vcmask 1043456
        %v1462 = vsel %vm1460, %v1344, 0
        %1464 = vmatprep.subr.mxu0 0.0
        %1465 = vmatpush1.msra.mxu0 %v1462
        %1466 = vmatprep.subr.mxu0 0.0
        %1467 = vmatpush1.msra.mxu0 0.0
        %1468 = vmatprep.subr.mxu0 0.0
        %1469 = vmatpush1.msra.mxu0 0.0
        %1470 = vmatprep.subr.mxu0 0.0
        %1471 = vmatpush1.msra.mxu0 0.0
        %1472 = vmatprep.subr.mxu0 0.0
        %1473 = vmatpush1.msra.mxu0 0.0
        %1474 = vmatprep.subr.mxu0 0.0
        %1475 = vmatpush1.msra.mxu0 0.0
        %1476 = vmatprep.subr.mxu0 0.0
        %1477 = vmatpush1.msra.mxu0 0.0
        %1478 = vmatprep.subr.mxu0 0.0
        %1479 = vmatpush1.msra.mxu0 0.0
        %1480 = vmatprep.subr.mxu0 0.0
        %1481 = vmatpush1.msra.mxu0 0.0
        %1482 = vmatprep.subr.mxu0 0.0
        %1483 = vmatpush1.msra.mxu0 0.0
        %1484 = vmatprep.subr.mxu0 0.0
        %1485 = vmatpush1.msra.mxu0 0.0
        %1486 = vmatprep.subr.mxu0 0.0
        %1487 = vmatpush1.msra.mxu0 0.0
        %1488 = vmatprep.subr.mxu0 0.0
        %1489 = vmatpush1.msra.mxu0 0.0
        %1490 = vmatprep.subr.mxu0 0.0
        %1491 = vmatpush1.msra.mxu0 0.0
        %1492 = vmatprep.subr.mxu0 0.0
        %1493 = vmatpush1.msra.mxu0 0.0
        %1494 = vmatprep.subr.mxu0 0.0
        %1495 = vmatpush1.msra.mxu0 0.0
        %1496 = vmatprep.subr.mxu0 0.0
        %1497 = vmatpush1.msra.mxu0 0.0
        %1498 = vmatprep.subr.mxu0 0.0
        %1499 = vmatpush1.msra.mxu0 0.0
        %1500 = vmatprep.subr.mxu0 0.0
        %1501 = vmatpush1.msra.mxu0 0.0
        %1502 = vmatprep.subr.mxu0 0.0
        %1503 = vmatpush1.msra.mxu0 0.0
        %1504 = vmatprep.subr.mxu0 0.0
        %1505 = vmatpush1.msra.mxu0 0.0
        %1506 = vmatprep.subr.mxu0 0.0
        %1507 = vmatpush1.msra.mxu0 0.0
        %1508 = vmatprep.subr.mxu0 0.0
        %1509 = vmatpush1.msra.mxu0 0.0
        %1510 = vmatprep.subr.mxu0 0.0
        %1511 = vmatpush1.msra.mxu0 0.0
        %1512 = vmatprep.subr.mxu0 0.0
        %1513 = vmatpush1.msra.mxu0 0.0
        %1514 = vmatprep.subr.mxu0 0.0
        %1515 = vmatpush1.msra.mxu0 0.0
        %1516 = vmatprep.subr.mxu0 0.0
        %1517 = vmatpush1.msra.mxu0 0.0
        %1518 = vmatprep.subr.mxu0 0.0
        %1519 = vmatpush1.msra.mxu0 0.0
        %1520 = vmatprep.subr.mxu0 0.0
        %1521 = vmatpush1.msra.mxu0 0.0
        %1522 = vmatprep.subr.mxu0 0.0
        %1523 = vmatpush1.msra.mxu0 0.0
        %1524 = vmatprep.subr.mxu0 0.0
        %1525 = vmatpush1.msra.mxu0 0.0
        %1526 = vmatprep.subr.mxu0 0.0
        %1527 = vmatpush1.msra.mxu0 0.0
        %1528 = vmatprep.mubr.f32.mxu0 0.0
        %1529 = vmatmul.mubr.f32.gmra.mrb[0].mxu0 %v1456
        %v1530 = vpop.f32.mrb[0].mxu0
        %v1531 = vadd.f32 %v1350, %v1530
        %v1532 = vpop.f32.mrb[0].mxu0
        %1533 = vmatprep.mubr.f32.mxu0 0.0
        %1534 = vmatmul.mubr.f32.gmra.mrb[0].mxu0 %v1458
        %v1535 = vpop.f32.mrb[0].mxu0
        %v1536 = vadd.f32 %v1350, %v1535
        %v1537 = vpop.f32.mrb[0].mxu0
        %1538 = vdwg.mxu0
        %1539 = vst [vmem:[%s423] sm:$0xff] %v1531
        %1540 = vst [vmem:[%s423 + $0x8] sm:$0xff] %v1536
        %s1541 = sand.u32 %s266, 1
        %s1542 = scalar_lea.sflag [#allocation3], %s1541
        %s1543 = sand.u32 %s266, 1
        %s1544 = smul.addr %s1543, 16
        %s1545 = scalar_lea.vmem [#allocation2], %s1544
        // Predicated region
        $region57: #{tpu_custom_call.1} parent=55 // pred_check
          %p1546 = pneg %p276
        $region58: #{tpu_custom_call.1} parent=55 // pred_check_branch
          %1548 = sbr.rel (%p1546) target = $region60
        $region59: #{tpu_custom_call.1} parent=55 // pred_region
          %s1549 = smul.u32 2, %s27
          %s1551 = ssub.s32 256, 256
          %1552 = vsyncadd %s1542, %s1551
          %s1553 = sadd.s32 %s28, %s1549
          %s1554 = smul.addr %s1553, 128
          %s1555 = scalar_lea.hbm %s9, %s1554
          %s1556 = sshll.u32 %s1545, 4
          %s1557 = int_to_ptr.vmem [resolvable:$true] %s1556
          %1562 = dma.vmem_to_hbm [thread:$0]  %s1557, 256, %s1555, %s1542, 128, 128, 8
        $region60: #{tpu_custom_call.1} parent=55 // pred_fallthru
          _
      $region56: #{tpu_custom_call.1} parent=5 // pred_fallthru
        _
      %p1563 = scmp.le.s32.totalorder 2, %s18
      // Predicated region
      $region61: #{tpu_custom_call.1} parent=5 // pred_check
        %p1564 = pneg %p1563
      $region62: #{tpu_custom_call.1} parent=5 // pred_check_branch
        %1566 = sbr.rel (%p1564) target = $region64
      $region63: #{tpu_custom_call.1} parent=5 // pred_region
        %s1567 = ssub.s32 %s18, 2
        // Predicated region
        $region65: #{tpu_custom_call.1} parent=63 // pred_check
          %p1568 = pneg %p282
        $region66: #{tpu_custom_call.1} parent=63 // pred_check_branch
          %1570 = sbr.rel (%p1568) target = $region68
        $region67: #{tpu_custom_call.1} parent=63 // pred_region
          %s1571 = sand.u32 %s267, 1
          %s1572 = scalar_lea.sflag [#allocation3], %s1571
          %s1573 = sand.u32 %s267, 1
          %s1574 = smul.addr %s1573, 16
          %s1575 = scalar_lea.vmem [#allocation2], %s1574
          %1576 = dma.done %s1572, 256
        $region68: #{tpu_custom_call.1} parent=63 // pred_fallthru
          _
      $region64: #{tpu_custom_call.1} parent=5 // pred_fallthru
        _
    $region6: #{tpu_custom_call.1} parent=1 // loop_footer
      %s22 = sadd.s32 1, %s18
    $region7: #{tpu_custom_call.1} parent=1 // loop_footer_branch
      %17 = sbr.rel target = $region3
    $region8: #{tpu_custom_call.1} parent=1 // loop_exit
      _
    %1577 = vsyncpa [#allocation3], 1
    %s1578 = scalar_lea.sflag [#allocation3], 1
    %1579 = vsyncpa %s1578, 1

</llo_original>
